<compile_context>
chip_gen: v5e
topology: v5e:2x2
jax: 0.10.0
libtpu: 0.0.40
codegen_flags: <defaults>
</compile_context>

<pallas_src>
import functools

import numpy as np
import jax
import jax.numpy as jnp
from jax import lax
from jax.experimental import pallas as pl
from jax.experimental.pallas import tpu as pltpu

BN_EPS = 1e-5


def _round_up(a, m):
    return (a + m - 1) // m * m


# --------------------------------- kernel 1 ---------------------------------
# grid = (row tiles i [parallel], note-column tiles k [arbitrary reduction]).
#   every step : xs[i-tile] += A[i-tile, k-tile] @ x[k-tile]      (int8 A -> bf16, MXU)
#   last k     : row-tiled epilogue -> h_pre tile (bf16) + masked BN partial stats.
def _hpre_kernel(a_ref, x_ref, xm_ref, xmnbr_ref,
                 invcnt_ref, cnt_ref, deg_ref, rowmask_ref,
                 w_neigh_ref, b_neigh_ref, w_sn_ref, b_sn_ref,
                 w_sl1_ref, w_sl2_ref, b_sl_ref,
                 w_o1_ref, w_o2_ref, w_o3_ref, b_out_ref,
                 hpre_ref, stats_ref,
                 xs_ref, *, tk):
    k = pl.program_id(1)

    @pl.when(k == 0)
    def _():
        xs_ref[...] = jnp.zeros_like(xs_ref)

    # x is a single resident VMEM block; slice the k-th row chunk (aligned).
    start = pl.multiple_of(k * tk, tk)
    xs_ref[...] += jnp.dot(a_ref[...].astype(jnp.bfloat16),
                           x_ref[pl.ds(start, tk), :],
                           preferred_element_type=jnp.float32)

    @pl.when(k == pl.num_programs(1) - 1)
    def _():
        xm = xm_ref[...]                                   # (tm, Dp) f32
        xm_bf = xm.astype(jnp.bfloat16)

        # h_scatter = A @ (x @ Wn + bn) == (A @ x) @ Wn + deg * bn   (reassociated)
        h_scatter = (jnp.dot(xs_ref[...].astype(jnp.bfloat16), w_neigh_ref[...],
                             preferred_element_type=jnp.float32)
                     + deg_ref[...] * b_neigh_ref[...])

        # SageConvScatter over the metrical chain: the dense S matmul is replaced by
        # pre-shifted neighbor features (xm_nbr) + the chain-degree count.
        sum_he = (jnp.dot(xmnbr_ref[...], w_sn_ref[...],
                          preferred_element_type=jnp.float32)
                  + cnt_ref[...] * b_sn_ref[...])
        # torch_scatter scatter(..., out=features.clone(), reduce='mean'):
        #   (features + scattered_sum) / clamp(count, 1)    (1/count precomputed)
        s_mean = (xm + sum_he) * invcnt_ref[...]
        h_seq = (jnp.dot(xm_bf, w_sl1_ref[...], preferred_element_type=jnp.float32)
                 + jnp.dot(s_mean.astype(jnp.bfloat16), w_sl2_ref[...],
                           preferred_element_type=jnp.float32)
                 + b_sl_ref[...])

        # conv_out(cat([h_scatter, x_metrical, h_seq], -1)) with pre-split weights
        h_pre = (jnp.dot(h_scatter.astype(jnp.bfloat16), w_o1_ref[...],
                         preferred_element_type=jnp.float32)
                 + jnp.dot(xm_bf, w_o2_ref[...], preferred_element_type=jnp.float32)
                 + jnp.dot(h_seq.astype(jnp.bfloat16), w_o3_ref[...],
                           preferred_element_type=jnp.float32)
                 + b_out_ref[...])
        # activation = Identity; dropout -> identity (eval mode)

        # two-pass BatchNorm, pass 1: masked per-tile column sums / sums-of-squares
        mask = rowmask_ref[...]                            # (tm, 1): 1.0 for valid rows
        hm = h_pre * mask
        col_sum = jnp.sum(hm, axis=0, keepdims=True)       # (1, Op)
        col_sq = jnp.sum(hm * h_pre, axis=0, keepdims=True)

        hpre_ref[...] = h_pre.astype(hpre_ref.dtype)       # bf16 for kernel 2
        pad = jnp.zeros((6, col_sum.shape[-1]), jnp.float32)
        stats_ref[...] = jnp.concatenate([col_sum, col_sq, pad], axis=0)


# --------------------------------- kernel 2 ---------------------------------
# out[i-tile] = A[i-tile, :] @ BN(h_pre)  ==  (A[i-tile, :] @ h_pre) * scale + deg * shift
# h[i-tile]   = h_pre[i-tile] * scale + shift          (BN apply, second pass)
def _scatter_out_kernel(a_ref, hfull_ref, htile_ref, deg_ref, scale_ref, shift_ref,
                        out_ref, h_ref):
    acc = jnp.dot(a_ref[...].astype(jnp.bfloat16), hfull_ref[...],
                  preferred_element_type=jnp.float32)
    out_ref[...] = (acc * scale_ref[...] + deg_ref[...] * shift_ref[...]).astype(out_ref.dtype)
    h_ref[...] = (htile_ref[...].astype(jnp.float32) * scale_ref[...]
                  + shift_ref[...]).astype(h_ref.dtype)


# --------------------------------- wrapper ----------------------------------


def _build_seq_forward(n_metrical, lengths=None):
    """Forward chain edges of the torch seq_index construction (src -> src+1)."""
    if lengths is None:
        src = np.arange(0, n_metrical - 1)
        dst = np.arange(1, n_metrical)
    else:
        srcs, dsts = [], []
        for i in range(len(lengths) - 1):
            srcs.append(np.arange(lengths[i], lengths[i + 1] - 1))
            dsts.append(np.arange(lengths[i] + 1, lengths[i + 1]))
        src = np.concatenate(srcs) if srcs else np.zeros((0,), np.int64)
        dst = np.concatenate(dsts) if dsts else np.zeros((0,), np.int64)
    return np.asarray(src, np.int32), np.asarray(dst, np.int32)


def _vmem_capacity_bytes():
    try:
        return int(pltpu.get_tpu_info().vmem_capacity_bytes)
    except Exception:
        return 64 << 20          # conservative fallback (v7x-sized)


def metrical_conv_layer(x_metrical, x, edge_index, params, lengths=None, *, tile=None):
    M, D = x_metrical.shape
    N = x.shape[0]
    # The original module indexes both scatters with the same edge list, which is only
    # well defined when the note and metrical node counts coincide.
    assert N == M, "MetricalConvLayer requires x.shape[0] == x_metrical.shape[0]"
    out_dim = params["b_out"].shape[-1]
    f32, bf16 = jnp.float32, jnp.bfloat16

    # ---- generation-gated tile size / VMEM budget ----
    vmem_cap = _vmem_capacity_bytes()
    if tile is None:
        tile = 512 if vmem_cap >= (96 << 20) else 256     # v5e/v6e: 512, v7x: 256

    Dp = _round_up(D, 128)
    Op = _round_up(out_dim, 128)
    tm = tile if N >= tile else _round_up(N, 32)          # 32-row min (int8 sublane packing)
    Np = _round_up(N, tm)
    Gi = Np // tm
    Gk = Np // tm

    def pad2(a, r, c, dt):
        return jnp.zeros((r, c), dt).at[:a.shape[0], :a.shape[1]].set(a.astype(dt))

    def padrow(b, c):
        b = jnp.reshape(b, (1, -1))
        return jnp.zeros((1, c), f32).at[:, :b.shape[1]].set(b.astype(f32))

    e0 = edge_index[0].astype(jnp.int32)
    e1 = edge_index[1].astype(jnp.int32)

    # ---- glue: dense adjacency built directly in int8 (both scatters use the same
    #      A[e1, e0] += 1 matrix since N == M); O(E) degree; chain masks; shifted
    #      neighbor features replacing the dense seq matrix ----
    # NOTE: edge multiplicities above 127 would overflow int8.
    A_i8 = jnp.zeros((Np, Np), jnp.int8).at[e1, e0].add(jnp.int8(1))
    deg = jnp.zeros((Np,), f32).at[e1].add(1.0).reshape(Np, 1)      # O(E) segment sum

    seq_src, seq_dst = _build_seq_forward(M, lengths)
    has_next = jnp.zeros((Np,), f32).at[seq_src].set(1.0)           # edge i -> i+1 exists
    has_prev = jnp.zeros((Np,), f32).at[seq_dst].set(1.0)           # edge i -> i-1 exists
    cnt = (has_next + has_prev).reshape(Np, 1)
    invcnt = 1.0 / jnp.maximum(cnt, 1.0)
    rowmask = (jnp.arange(Np) < M).astype(f32).reshape(Np, 1)

    xmp = pad2(x_metrical, Np, Dp, f32)
    xm_down = jnp.concatenate([xmp[1:], jnp.zeros((1, Dp), f32)], axis=0)   # row i -> xm[i+1]
    xm_up = jnp.concatenate([jnp.zeros((1, Dp), f32), xmp[:-1]], axis=0)    # row i -> xm[i-1]
    xm_nbr = (has_next[:, None] * xm_down + has_prev[:, None] * xm_up).astype(bf16)
    xp = pad2(x, Np, Dp, bf16)

    w_neigh = pad2(params["w_neigh"], Dp, Dp, bf16)
    w_sn = pad2(params["w_sn"], Dp, Dp, bf16)
    w_sl1 = pad2(params["w_sl1"], Dp, Dp, bf16)
    w_sl2 = pad2(params["w_sl2"], Dp, Dp, bf16)
    w_o1 = pad2(params["w_o1"], Dp, Op, bf16)
    w_o2 = pad2(params["w_o2"], Dp, Op, bf16)
    w_o3 = pad2(params["w_o3"], Dp, Op, bf16)
    b_neigh = padrow(params["b_neigh"], Dp)
    b_sn = padrow(params["b_sn"], Dp)
    b_sl = padrow(params["b_sl"], Dp)
    b_out = padrow(params["b_out"], Op)
    gamma = jnp.zeros((Op,), f32).at[:out_dim].set(params["gamma"].reshape(-1).astype(f32))
    beta = jnp.zeros((Op,), f32).at[:out_dim].set(params["beta"].reshape(-1).astype(f32))

    # ---- explicit VMEM budget, generation-gated (>=16 MiB headroom on v7x) ----
    est1 = (3 * tm * tm                                   # A int8 tiles (buffered)
            + Np * Dp * 2                                 # x resident (bf16)
            + 2 * tm * Dp * (4 + 2)                       # xm f32 + xm_nbr bf16 tiles
            + 2 * 4 * tm * 4                              # (tm, 1) per-row vectors
            + 2 * 2 * (4 * Dp * Dp + 3 * Dp * Op)         # weights (bf16)
            + 2 * (tm * Op * 2 + 8 * Op * 4)              # outputs (h_pre bf16, stats f32)
            + tm * Dp * 4                                 # xs scratch
            + 10 * tm * max(Dp, Op) * 4)                  # epilogue temporaries headroom
    est2 = (3 * tm * Np                                   # A row blocks (int8)
            + Np * Op * 2                                 # resident h_pre (bf16)
            + 2 * tm * Op * (2 + 4 + 4)                   # h_pre tile + two f32 out tiles
            + 2 * Op * 4 + 2 * tm * 4)
    vmem_limit = int(min(max(2 * max(est1, est2), 32 << 20), vmem_cap - (16 << 20)))

    def const2(shape):
        return pl.BlockSpec(shape, lambda i, k: (0, 0))

    in_specs1 = [
        pl.BlockSpec((tm, tm), lambda i, k: (i, k)),      # A (int8), streamed 2-D tiles
        pl.BlockSpec((Np, Dp), lambda i, k: (0, 0)),      # x, resident (read from HBM once)
        pl.BlockSpec((tm, Dp), lambda i, k: (i, 0)),      # x_metrical row tile (f32)
        pl.BlockSpec((tm, Dp), lambda i, k: (i, 0)),      # pre-shifted chain neighbors (bf16)
        pl.BlockSpec((tm, 1), lambda i, k: (i, 0)),       # 1 / clamp(count, 1)
        pl.BlockSpec((tm, 1), lambda i, k: (i, 0)),       # chain count
        pl.BlockSpec((tm, 1), lambda i, k: (i, 0)),       # note-edge in-degree
        pl.BlockSpec((tm, 1), lambda i, k: (i, 0)),       # valid-row mask (BN stats)
        const2((Dp, Dp)), const2((1, Dp)),                # neigh
        const2((Dp, Dp)), const2((1, Dp)),                # seq.neigh_linear
        const2((Dp, Dp)), const2((Dp, Dp)), const2((1, Dp)),    # seq.linear (pre-split)
        const2((Dp, Op)), const2((Dp, Op)), const2((Dp, Op)), const2((1, Op)),  # conv_out
    ]
    out_specs1 = (
        pl.BlockSpec((tm, Op), lambda i, k: (i, 0)),      # h_pre (bf16), lane-dense
        pl.BlockSpec((8, Op), lambda i, k: (i, 0)),       # per-tile BN partial stats
    )

    flops1 = int(2 * Np * Np * Dp + 2 * Np * Dp * (4 * Dp + 3 * Op))
    bytes1 = int(Np * Np + Np * Dp * (2 + 4 + 2) + 2 * (4 * Dp * Dp + 3 * Dp * Op)
                 + Np * Op * 2 + Gi * 8 * Op * 4 + 4 * Np * 4)

    hpre_bf, stats = pl.pallas_call(
        functools.partial(_hpre_kernel, tk=tm),
        out_shape=(jax.ShapeDtypeStruct((Np, Op), bf16),
                   jax.ShapeDtypeStruct((Gi * 8, Op), f32)),
        grid=(Gi, Gk),
        in_specs=in_specs1,
        out_specs=out_specs1,
        scratch_shapes=[pltpu.VMEM((tm, Dp), f32)],
        compiler_params=pltpu.CompilerParams(
            dimension_semantics=("parallel", "arbitrary"),
            vmem_limit_bytes=vmem_limit),
        cost_estimate=pl.CostEstimate(flops=flops1, transcendentals=0,
                                      bytes_accessed=bytes1),
    )(A_i8, xp, xmp, xm_nbr, invcnt, cnt, deg, rowmask,
      w_neigh, b_neigh, w_sn, b_sn, w_sl1, w_sl2, b_sl,
      w_o1, w_o2, w_o3, b_out)

    # ---- tiny XLA glue: finalize BatchNorm batch stats into fused scale / shift ----
    g = stats.reshape(Gi, 8, Op)
    tot = jnp.sum(g[:, 0, :], axis=0)
    totsq = jnp.sum(g[:, 1, :], axis=0)
    mean = tot / float(M)
    var = jnp.maximum(totsq / float(M) - mean * mean, 0.0)   # biased variance (train mode)
    rstd = lax.rsqrt(var + BN_EPS)
    scale = (rstd * gamma).reshape(1, Op)
    shift = (beta - mean * rstd * gamma).reshape(1, Op)

    flops2 = int(2 * Np * Np * Op)
    bytes2 = int(Np * Np + 3 * Np * Op * 2 + 2 * Np * Op * 4 + Np * 4)

    out_pad, h_pad = pl.pallas_call(
        _scatter_out_kernel,
        out_shape=(jax.ShapeDtypeStruct((Np, Op), f32),
                   jax.ShapeDtypeStruct((Np, Op), f32)),
        grid=(Gi,),
        in_specs=[pl.BlockSpec((tm, Np), lambda i: (i, 0)),   # A row tiles (int8)
                  pl.BlockSpec((Np, Op), lambda i: (0, 0)),   # h_pre, resident (bf16)
                  pl.BlockSpec((tm, Op), lambda i: (i, 0)),   # h_pre row tile (bf16)
                  pl.BlockSpec((tm, 1), lambda i: (i, 0)),    # deg
                  pl.BlockSpec((1, Op), lambda i: (0, 0)),    # BN scale
                  pl.BlockSpec((1, Op), lambda i: (0, 0))],   # BN shift
        out_specs=(pl.BlockSpec((tm, Op), lambda i: (i, 0)),
                   pl.BlockSpec((tm, Op), lambda i: (i, 0))),
        compiler_params=pltpu.CompilerParams(
            dimension_semantics=("parallel",),
            vmem_limit_bytes=vmem_limit),
        cost_estimate=pl.CostEstimate(flops=flops2, transcendentals=0,
                                      bytes_accessed=bytes2),
    )(A_i8, hpre_bf, hpre_bf, deg, scale, shift)

    return out_pad[:N, :out_dim], h_pad[:M, :out_dim]


# --------------------------- parameter construction ---------------------------

def _xavier_uniform(key, shape, gain):
    fan_in, fan_out = shape
    bound = gain * (6.0 / (fan_in + fan_out)) ** 0.5
    return jax.random.uniform(key, shape, jnp.float32, -bound, bound)


def init_params(key, in_dim, out_dim):
    gain = 2.0 ** 0.5  # relu gain
    ks = jax.random.split(key, 6)
    w_sl = _xavier_uniform(ks[2], (2 * in_dim, in_dim), gain)
    w_out = _xavier_uniform(ks[3], (3 * in_dim, out_dim), gain)
    return dict(
        # weights stored as [in, out] so the kernel computes x @ W
        w_neigh=_xavier_uniform(ks[0], (in_dim, in_dim), gain),
        b_neigh=jnp.zeros((1, in_dim), jnp.float32),
        w_sn=_xavier_uniform(ks[1], (in_dim, in_dim), gain),
        b_sn=jnp.zeros((1, in_dim), jnp.float32),
        w_sl1=w_sl[:in_dim], w_sl2=w_sl[in_dim:],
        b_sl=jnp.zeros((1, in_dim), jnp.float32),
        w_o1=w_out[:in_dim], w_o2=w_out[in_dim:2 * in_dim], w_o3=w_out[2 * in_dim:],
        b_out=jnp.zeros((1, out_dim), jnp.float32),
        gamma=jnp.ones((1, out_dim), jnp.float32),
        beta=jnp.zeros((1, out_dim), jnp.float32),
    )


# ----------------------------- pure-JAX reference -----------------------------

def reference(x_metrical, x, edge_index, params, lengths=None):
    M, D = x_metrical.shape
    N = x.shape[0]
    out_dim = params["b_out"].shape[-1]
    e0, e1 = edge_index[0], edge_index[1]
    mm = functools.partial(jnp.dot, precision=lax.Precision.HIGHEST)

    h_neigh = mm(x, params["w_neigh"]) + params["b_neigh"]
    h_scatter = jnp.zeros((M, D), jnp.float32).at[e1].add(h_neigh[e0])

    seq_src_f, seq_dst_f = _build_seq_forward(M, lengths)
    seq_src = jnp.asarray(np.concatenate([seq_src_f, seq_dst_f]), jnp.int32)
    seq_dst = jnp.asarray(np.concatenate([seq_dst_f, seq_src_f]), jnp.int32)
    hs = mm(x_metrical, params["w_sn"]) + params["b_sn"]
    sum_he = jnp.zeros((M, D), jnp.float32).at[seq_src].add(hs[seq_dst])
    count = jnp.zeros((M,), jnp.float32).at[seq_src].add(1.0)
    count = jnp.maximum(count, 1.0)[:, None]
    s_mean = (x_metrical + sum_he) / count
    h_seq = mm(x_metrical, params["w_sl1"]) + mm(s_mean, params["w_sl2"]) + params["b_sl"]

    h = (mm(h_scatter, params["w_o1"]) + mm(x_metrical, params["w_o2"])
         + mm(h_seq, params["w_o3"]) + params["b_out"])
    mean = jnp.mean(h, axis=0, keepdims=True)
    var = jnp.mean((h - mean) ** 2, axis=0, keepdims=True)
    h = (h - mean) * lax.rsqrt(var + BN_EPS) * params["gamma"] + params["beta"]

    out = jnp.zeros((N, out_dim), jnp.float32).at[e1].add(h[e0])
    return out, h


if __name__ == "__main__":
    key = jax.random.PRNGKey(0)
    in_dim, out_dim = 32, 32
    M = N = 16          # metrical nodes == note nodes (required by the module's scatters)
    E = 40

    k_xm, k_x, k_e0, k_e1, k_p = jax.random.split(key, 5)
    x_metrical = jax.random.normal(k_xm, (M, in_dim), jnp.float32)
    x = jax.random.normal(k_x, (N, in_dim), jnp.float32)
    edge_index = jnp.stack([
        jax.random.randint(k_e0, (E,), 0, N),
        jax.random.randint(k_e1, (E,), 0, M),
    ]).astype(jnp.int32)

    params = init_params(k_p, in_dim, out_dim)

    out, h = metrical_conv_layer(x_metrical, x, edge_index, params)
    jax.block_until_ready((out, h))

    out_ref, h_ref = reference(x_metrical, x, edge_index, params)
    assert out.shape == (N, out_dim) and h.shape == (M, out_dim)
    # bf16 MXU operands + f32 accumulation vs. a float32 HIGHEST-precision reference.
    assert jnp.allclose(h, h_ref, atol=1e-1, rtol=1e-1), \
        float(jnp.max(jnp.abs(h - h_ref)))
    assert jnp.allclose(out, out_ref, atol=1e-1, rtol=1e-1), \
        float(jnp.max(jnp.abs(out - out_ref)))

    print("KERNEL_OK")
</pallas_src>

<mosaic_0001>
module attributes {stable_mosaic.version = 11 : i64} {
  func.func @_hpre_kernel(%arg0: i32, %arg1: i32, %arg2: memref<32x32xi8, #tpu.memory_space<vmem>>, %arg3: memref<32x128xbf16, #tpu.memory_space<vmem>>, %arg4: memref<32x128xf32, #tpu.memory_space<vmem>>, %arg5: memref<32x128xbf16, #tpu.memory_space<vmem>>, %arg6: memref<32x1xf32, #tpu.memory_space<vmem>>, %arg7: memref<32x1xf32, #tpu.memory_space<vmem>>, %arg8: memref<32x1xf32, #tpu.memory_space<vmem>>, %arg9: memref<32x1xf32, #tpu.memory_space<vmem>>, %arg10: memref<128x128xbf16, #tpu.memory_space<vmem>>, %arg11: memref<1x128xf32, #tpu.memory_space<vmem>>, %arg12: memref<128x128xbf16, #tpu.memory_space<vmem>>, %arg13: memref<1x128xf32, #tpu.memory_space<vmem>>, %arg14: memref<128x128xbf16, #tpu.memory_space<vmem>>, %arg15: memref<128x128xbf16, #tpu.memory_space<vmem>>, %arg16: memref<1x128xf32, #tpu.memory_space<vmem>>, %arg17: memref<128x128xbf16, #tpu.memory_space<vmem>>, %arg18: memref<128x128xbf16, #tpu.memory_space<vmem>>, %arg19: memref<128x128xbf16, #tpu.memory_space<vmem>>, %arg20: memref<1x128xf32, #tpu.memory_space<vmem>>, %arg21: memref<32x128xbf16, #tpu.memory_space<vmem>>, %arg22: memref<8x128xf32, #tpu.memory_space<vmem>>, %arg23: memref<32x128xf32, #tpu.memory_space<vmem>>) attributes {dimension_semantics = [#tpu.dimension_semantics<parallel>, #tpu.dimension_semantics<arbitrary>], iteration_bounds = array<i64: 1, 1>, scalar_prefetch = 0 : i64, scratch_operands = 1 : i64, tpu.core_type = #tpu.core_type<tc>, window_params = [{transform_indices = @transform_0, window_bounds = array<i64: 32, 32>}, {pipeline_mode = #tpu.pipeline_mode<synchronous>, transform_indices = @transform_1, window_bounds = array<i64: 32, 128>}, {transform_indices = @transform_2, window_bounds = array<i64: 32, 128>}, {transform_indices = @transform_3, window_bounds = array<i64: 32, 128>}, {transform_indices = @transform_4, window_bounds = array<i64: 32, 1>}, {transform_indices = @transform_5, window_bounds = array<i64: 32, 1>}, {transform_indices = @transform_6, window_bounds = array<i64: 32, 1>}, {transform_indices = @transform_7, window_bounds = array<i64: 32, 1>}, {pipeline_mode = #tpu.pipeline_mode<synchronous>, transform_indices = @transform_8, window_bounds = array<i64: 128, 128>}, {pipeline_mode = #tpu.pipeline_mode<synchronous>, transform_indices = @transform_9, window_bounds = array<i64: 1, 128>}, {pipeline_mode = #tpu.pipeline_mode<synchronous>, transform_indices = @transform_10, window_bounds = array<i64: 128, 128>}, {pipeline_mode = #tpu.pipeline_mode<synchronous>, transform_indices = @transform_11, window_bounds = array<i64: 1, 128>}, {pipeline_mode = #tpu.pipeline_mode<synchronous>, transform_indices = @transform_12, window_bounds = array<i64: 128, 128>}, {pipeline_mode = #tpu.pipeline_mode<synchronous>, transform_indices = @transform_13, window_bounds = array<i64: 128, 128>}, {pipeline_mode = #tpu.pipeline_mode<synchronous>, transform_indices = @transform_14, window_bounds = array<i64: 1, 128>}, {pipeline_mode = #tpu.pipeline_mode<synchronous>, transform_indices = @transform_15, window_bounds = array<i64: 128, 128>}, {pipeline_mode = #tpu.pipeline_mode<synchronous>, transform_indices = @transform_16, window_bounds = array<i64: 128, 128>}, {pipeline_mode = #tpu.pipeline_mode<synchronous>, transform_indices = @transform_17, window_bounds = array<i64: 128, 128>}, {pipeline_mode = #tpu.pipeline_mode<synchronous>, transform_indices = @transform_18, window_bounds = array<i64: 1, 128>}, {transform_indices = @transform_19, window_bounds = array<i64: 32, 128>}, {transform_indices = @transform_20, window_bounds = array<i64: 8, 128>}]} {
    %c0_i32 = arith.constant 0 : i32
    %0 = arith.cmpi eq, %arg1, %c0_i32 : i32
    %1 = arith.extui %0 : i1 to i32
    %c0_i32_0 = arith.constant 0 : i32
    %2 = arith.cmpi ne, %1, %c0_i32_0 : i32
    scf.if %2 {
      %cst_9 = arith.constant 0.000000e+00 : f32
      %16 = vector.broadcast %cst_9 : f32 to vector<32x128xf32>
      %c0_10 = arith.constant 0 : index
      %c0_11 = arith.constant 0 : index
      %17 = vector.load %arg23[%c0_10, %c0_11] : memref<32x128xf32, #tpu.memory_space<vmem>>, vector<32x128xf32>
      tpu.vector_store %arg23[%c0_10, %c0_11], %16 {strides = array<i32>} : memref<32x128xf32, #tpu.memory_space<vmem>>, vector<32x128xf32>,
    } else {
    }
    %c32_i32 = arith.constant 32 : i32
    %3 = arith.muli %arg1, %c32_i32 : i32
    %4 = tpu.assume_multiple %3, 32 : i32
    %c0 = arith.constant 0 : index
    %c0_1 = arith.constant 0 : index
    %5 = vector.load %arg23[%c0, %c0_1] : memref<32x128xf32, #tpu.memory_space<vmem>>, vector<32x128xf32>
    %c0_2 = arith.constant 0 : index
    %c0_3 = arith.constant 0 : index
    %6 = vector.load %arg2[%c0_2, %c0_3] : memref<32x32xi8, #tpu.memory_space<vmem>>, vector<32x32xi8>
    %7 = arith.sitofp %6 : vector<32x32xi8> to vector<32x32xbf16>
    %8 = arith.index_cast %4 : i32 to index
    %c0_4 = arith.constant 0 : index
    %9 = vector.load %arg3[%8, %c0_4] : memref<32x128xbf16, #tpu.memory_space<vmem>>, vector<32x128xbf16>
    %cst = arith.constant dense<0.000000e+00> : vector<32x128xf32>
    %10 = tpu.matmul %7, %9, %cst {dimension_numbers = #tpu.dot_dimension_numbers<[1], [0], [0], [1], [0, 0, 1, 1], [], []>} : vector<32x32xbf16>, vector<32x128xbf16>, vector<32x128xf32> -> vector<32x128xf32>
    %11 = arith.addf %5, %10 : vector<32x128xf32>
    %c0_5 = arith.constant 0 : index
    %c0_6 = arith.constant 0 : index
    %12 = vector.load %arg23[%c0_5, %c0_6] : memref<32x128xf32, #tpu.memory_space<vmem>>, vector<32x128xf32>
    tpu.vector_store %arg23[%c0_5, %c0_6], %11 {strides = array<i32>} : memref<32x128xf32, #tpu.memory_space<vmem>>, vector<32x128xf32>,
    %c0_i32_7 = arith.constant 0 : i32
    %13 = arith.cmpi eq, %arg1, %c0_i32_7 : i32
    %14 = arith.extui %13 : i1 to i32
    %c0_i32_8 = arith.constant 0 : i32
    %15 = arith.cmpi ne, %14, %c0_i32_8 : i32
    scf.if %15 {
      %c0_9 = arith.constant 0 : index
      %c0_10 = arith.constant 0 : index
      %16 = vector.load %arg4[%c0_9, %c0_10] : memref<32x128xf32, #tpu.memory_space<vmem>>, vector<32x128xf32>
      %17 = arith.truncf %16 : vector<32x128xf32> to vector<32x128xbf16>
      %c0_11 = arith.constant 0 : index
      %c0_12 = arith.constant 0 : index
      %18 = vector.load %arg23[%c0_11, %c0_12] : memref<32x128xf32, #tpu.memory_space<vmem>>, vector<32x128xf32>
      %19 = arith.truncf %18 : vector<32x128xf32> to vector<32x128xbf16>
      %c0_13 = arith.constant 0 : index
      %c0_14 = arith.constant 0 : index
      %20 = vector.load %arg10[%c0_13, %c0_14] : memref<128x128xbf16, #tpu.memory_space<vmem>>, vector<128x128xbf16>
      %cst_15 = arith.constant dense<0.000000e+00> : vector<32x128xf32>
      %21 = tpu.matmul %19, %20, %cst_15 {dimension_numbers = #tpu.dot_dimension_numbers<[1], [0], [0], [1], [0, 0, 1, 1], [], []>} : vector<32x128xbf16>, vector<128x128xbf16>, vector<32x128xf32> -> vector<32x128xf32>
      %c0_16 = arith.constant 0 : index
      %c0_17 = arith.constant 0 : index
      %22 = vector.load %arg8[%c0_16, %c0_17] : memref<32x1xf32, #tpu.memory_space<vmem>>, vector<32x1xf32>
      %c0_18 = arith.constant 0 : index
      %c0_19 = arith.constant 0 : index
      %23 = vector.load %arg11[%c0_18, %c0_19] : memref<1x128xf32, #tpu.memory_space<vmem>>, vector<1x128xf32>
      %24 = vector.broadcast %22 : vector<32x1xf32> to vector<32x128xf32>
      %25 = vector.broadcast %23 : vector<1x128xf32> to vector<32x128xf32>
      %26 = arith.mulf %24, %25 : vector<32x128xf32>
      %27 = arith.addf %21, %26 : vector<32x128xf32>
      %c0_20 = arith.constant 0 : index
      %c0_21 = arith.constant 0 : index
      %28 = vector.load %arg5[%c0_20, %c0_21] : memref<32x128xbf16, #tpu.memory_space<vmem>>, vector<32x128xbf16>
      %c0_22 = arith.constant 0 : index
      %c0_23 = arith.constant 0 : index
      %29 = vector.load %arg12[%c0_22, %c0_23] : memref<128x128xbf16, #tpu.memory_space<vmem>>, vector<128x128xbf16>
      %cst_24 = arith.constant dense<0.000000e+00> : vector<32x128xf32>
      %30 = tpu.matmul %28, %29, %cst_24 {dimension_numbers = #tpu.dot_dimension_numbers<[1], [0], [0], [1], [0, 0, 1, 1], [], []>} : vector<32x128xbf16>, vector<128x128xbf16>, vector<32x128xf32> -> vector<32x128xf32>
      %c0_25 = arith.constant 0 : index
      %c0_26 = arith.constant 0 : index
      %31 = vector.load %arg7[%c0_25, %c0_26] : memref<32x1xf32, #tpu.memory_space<vmem>>, vector<32x1xf32>
      %c0_27 = arith.constant 0 : index
      %c0_28 = arith.constant 0 : index
      %32 = vector.load %arg13[%c0_27, %c0_28] : memref<1x128xf32, #tpu.memory_space<vmem>>, vector<1x128xf32>
      %33 = vector.broadcast %31 : vector<32x1xf32> to vector<32x128xf32>
      %34 = vector.broadcast %32 : vector<1x128xf32> to vector<32x128xf32>
      %35 = arith.mulf %33, %34 : vector<32x128xf32>
      %36 = arith.addf %30, %35 : vector<32x128xf32>
      %37 = arith.addf %16, %36 : vector<32x128xf32>
      %c0_29 = arith.constant 0 : index
      %c0_30 = arith.constant 0 : index
      %38 = vector.load %arg6[%c0_29, %c0_30] : memref<32x1xf32, #tpu.memory_space<vmem>>, vector<32x1xf32>
      %39 = vector.broadcast %38 : vector<32x1xf32> to vector<32x128xf32>
      %40 = arith.mulf %37, %39 : vector<32x128xf32>
      %c0_31 = arith.constant 0 : index
      %c0_32 = arith.constant 0 : index
      %41 = vector.load %arg14[%c0_31, %c0_32] : memref<128x128xbf16, #tpu.memory_space<vmem>>, vector<128x128xbf16>
      %cst_33 = arith.constant dense<0.000000e+00> : vector<32x128xf32>
      %42 = tpu.matmul %17, %41, %cst_33 {dimension_numbers = #tpu.dot_dimension_numbers<[1], [0], [0], [1], [0, 0, 1, 1], [], []>} : vector<32x128xbf16>, vector<128x128xbf16>, vector<32x128xf32> -> vector<32x128xf32>
      %43 = arith.truncf %40 : vector<32x128xf32> to vector<32x128xbf16>
      %c0_34 = arith.constant 0 : index
      %c0_35 = arith.constant 0 : index
      %44 = vector.load %arg15[%c0_34, %c0_35] : memref<128x128xbf16, #tpu.memory_space<vmem>>, vector<128x128xbf16>
      %cst_36 = arith.constant dense<0.000000e+00> : vector<32x128xf32>
      %45 = tpu.matmul %43, %44, %cst_36 {dimension_numbers = #tpu.dot_dimension_numbers<[1], [0], [0], [1], [0, 0, 1, 1], [], []>} : vector<32x128xbf16>, vector<128x128xbf16>, vector<32x128xf32> -> vector<32x128xf32>
      %46 = arith.addf %42, %45 : vector<32x128xf32>
      %c0_37 = arith.constant 0 : index
      %c0_38 = arith.constant 0 : index
      %47 = vector.load %arg16[%c0_37, %c0_38] : memref<1x128xf32, #tpu.memory_space<vmem>>, vector<1x128xf32>
      %48 = vector.broadcast %47 : vector<1x128xf32> to vector<32x128xf32>
      %49 = arith.addf %46, %48 : vector<32x128xf32>
      %50 = arith.truncf %27 : vector<32x128xf32> to vector<32x128xbf16>
      %c0_39 = arith.constant 0 : index
      %c0_40 = arith.constant 0 : index
      %51 = vector.load %arg17[%c0_39, %c0_40] : memref<128x128xbf16, #tpu.memory_space<vmem>>, vector<128x128xbf16>
      %cst_41 = arith.constant dense<0.000000e+00> : vector<32x128xf32>
      %52 = tpu.matmul %50, %51, %cst_41 {dimension_numbers = #tpu.dot_dimension_numbers<[1], [0], [0], [1], [0, 0, 1, 1], [], []>} : vector<32x128xbf16>, vector<128x128xbf16>, vector<32x128xf32> -> vector<32x128xf32>
      %c0_42 = arith.constant 0 : index
      %c0_43 = arith.constant 0 : index
      %53 = vector.load %arg18[%c0_42, %c0_43] : memref<128x128xbf16, #tpu.memory_space<vmem>>, vector<128x128xbf16>
      %cst_44 = arith.constant dense<0.000000e+00> : vector<32x128xf32>
      %54 = tpu.matmul %17, %53, %cst_44 {dimension_numbers = #tpu.dot_dimension_numbers<[1], [0], [0], [1], [0, 0, 1, 1], [], []>} : vector<32x128xbf16>, vector<128x128xbf16>, vector<32x128xf32> -> vector<32x128xf32>
      %55 = arith.addf %52, %54 : vector<32x128xf32>
      %56 = arith.truncf %49 : vector<32x128xf32> to vector<32x128xbf16>
      %c0_45 = arith.constant 0 : index
      %c0_46 = arith.constant 0 : index
      %57 = vector.load %arg19[%c0_45, %c0_46] : memref<128x128xbf16, #tpu.memory_space<vmem>>, vector<128x128xbf16>
      %cst_47 = arith.constant dense<0.000000e+00> : vector<32x128xf32>
      %58 = tpu.matmul %56, %57, %cst_47 {dimension_numbers = #tpu.dot_dimension_numbers<[1], [0], [0], [1], [0, 0, 1, 1], [], []>} : vector<32x128xbf16>, vector<128x128xbf16>, vector<32x128xf32> -> vector<32x128xf32>
      %59 = arith.addf %55, %58 : vector<32x128xf32>
      %c0_48 = arith.constant 0 : index
      %c0_49 = arith.constant 0 : index
      %60 = vector.load %arg20[%c0_48, %c0_49] : memref<1x128xf32, #tpu.memory_space<vmem>>, vector<1x128xf32>
      %61 = vector.broadcast %60 : vector<1x128xf32> to vector<32x128xf32>
      %62 = arith.addf %59, %61 : vector<32x128xf32>
      %c0_50 = arith.constant 0 : index
      %c0_51 = arith.constant 0 : index
      %63 = vector.load %arg9[%c0_50, %c0_51] : memref<32x1xf32, #tpu.memory_space<vmem>>, vector<32x1xf32>
      %64 = vector.broadcast %63 : vector<32x1xf32> to vector<32x128xf32>
      %65 = arith.mulf %62, %64 : vector<32x128xf32>
      %cst_52 = arith.constant dense<0.000000e+00> : vector<128xf32>
      %66 = vector.multi_reduction <add>, %65, %cst_52 [0] : vector<32x128xf32> to vector<128xf32>
      %67 = vector.shape_cast %66 : vector<128xf32> to vector<1x128xf32>
      %68 = arith.mulf %65, %62 : vector<32x128xf32>
      %cst_53 = arith.constant dense<0.000000e+00> : vector<128xf32>
      %69 = vector.multi_reduction <add>, %68, %cst_53 [0] : vector<32x128xf32> to vector<128xf32>
      %70 = vector.shape_cast %69 : vector<128xf32> to vector<1x128xf32>
      %71 = arith.truncf %62 : vector<32x128xf32> to vector<32x128xbf16>
      %c0_54 = arith.constant 0 : index
      %c0_55 = arith.constant 0 : index
      %72 = vector.load %arg21[%c0_54, %c0_55] : memref<32x128xbf16, #tpu.memory_space<vmem>>, vector<32x128xbf16>
      tpu.vector_store %arg21[%c0_54, %c0_55], %71 {strides = array<i32>} : memref<32x128xbf16, #tpu.memory_space<vmem>>, vector<32x128xbf16>,
      %cst_56 = arith.constant 0.000000e+00 : f32
      %73 = vector.broadcast %cst_56 : f32 to vector<6x128xf32>
      %74 = tpu.concatenate %67, %70, %73 in 0 : vector<1x128xf32>, vector<1x128xf32>, vector<6x128xf32> -> vector<8x128xf32>
      %c0_57 = arith.constant 0 : index
      %c0_58 = arith.constant 0 : index
      %75 = vector.load %arg22[%c0_57, %c0_58] : memref<8x128xf32, #tpu.memory_space<vmem>>, vector<8x128xf32>
      tpu.vector_store %arg22[%c0_57, %c0_58], %74 {strides = array<i32>} : memref<8x128xf32, #tpu.memory_space<vmem>>, vector<8x128xf32>,
    } else {
    }
    return
  }
  func.func @transform_0(%arg0: i32, %arg1: i32) -> (i32, i32) {
    %c0_i32 = arith.constant 0 : i32
    return %arg0, %arg1 : i32, i32
  }
  func.func @transform_1(%arg0: i32, %arg1: i32) -> (i32, i32) {
    %c0_i32 = arith.constant 0 : i32
    %c0_i32_0 = arith.constant 0 : i32
    %c0_i32_1 = arith.constant 0 : i32
    return %c0_i32, %c0_i32_0 : i32, i32
  }
  func.func @transform_2(%arg0: i32, %arg1: i32) -> (i32, i32) {
    %c0_i32 = arith.constant 0 : i32
    %c0_i32_0 = arith.constant 0 : i32
    return %arg0, %c0_i32 : i32, i32
  }
  func.func @transform_3(%arg0: i32, %arg1: i32) -> (i32, i32) {
    %c0_i32 = arith.constant 0 : i32
    %c0_i32_0 = arith.constant 0 : i32
    return %arg0, %c0_i32 : i32, i32
  }
  func.func @transform_4(%arg0: i32, %arg1: i32) -> (i32, i32) {
    %c0_i32 = arith.constant 0 : i32
    %c0_i32_0 = arith.constant 0 : i32
    return %arg0, %c0_i32 : i32, i32
  }
  func.func @transform_5(%arg0: i32, %arg1: i32) -> (i32, i32) {
    %c0_i32 = arith.constant 0 : i32
    %c0_i32_0 = arith.constant 0 : i32
    return %arg0, %c0_i32 : i32, i32
  }
  func.func @transform_6(%arg0: i32, %arg1: i32) -> (i32, i32) {
    %c0_i32 = arith.constant 0 : i32
    %c0_i32_0 = arith.constant 0 : i32
    return %arg0, %c0_i32 : i32, i32
  }
  func.func @transform_7(%arg0: i32, %arg1: i32) -> (i32, i32) {
    %c0_i32 = arith.constant 0 : i32
    %c0_i32_0 = arith.constant 0 : i32
    return %arg0, %c0_i32 : i32, i32
  }
  func.func @transform_8(%arg0: i32, %arg1: i32) -> (i32, i32) {
    %c0_i32 = arith.constant 0 : i32
    %c0_i32_0 = arith.constant 0 : i32
    %c0_i32_1 = arith.constant 0 : i32
    return %c0_i32, %c0_i32_0 : i32, i32
  }
  func.func @transform_9(%arg0: i32, %arg1: i32) -> (i32, i32) {
    %c0_i32 = arith.constant 0 : i32
    %c0_i32_0 = arith.constant 0 : i32
    %c0_i32_1 = arith.constant 0 : i32
    return %c0_i32, %c0_i32_0 : i32, i32
  }
  func.func @transform_10(%arg0: i32, %arg1: i32) -> (i32, i32) {
    %c0_i32 = arith.constant 0 : i32
    %c0_i32_0 = arith.constant 0 : i32
    %c0_i32_1 = arith.constant 0 : i32
    return %c0_i32, %c0_i32_0 : i32, i32
  }
  func.func @transform_11(%arg0: i32, %arg1: i32) -> (i32, i32) {
    %c0_i32 = arith.constant 0 : i32
    %c0_i32_0 = arith.constant 0 : i32
    %c0_i32_1 = arith.constant 0 : i32
    return %c0_i32, %c0_i32_0 : i32, i32
  }
  func.func @transform_12(%arg0: i32, %arg1: i32) -> (i32, i32) {
    %c0_i32 = arith.constant 0 : i32
    %c0_i32_0 = arith.constant 0 : i32
    %c0_i32_1 = arith.constant 0 : i32
    return %c0_i32, %c0_i32_0 : i32, i32
  }
  func.func @transform_13(%arg0: i32, %arg1: i32) -> (i32, i32) {
    %c0_i32 = arith.constant 0 : i32
    %c0_i32_0 = arith.constant 0 : i32
    %c0_i32_1 = arith.constant 0 : i32
    return %c0_i32, %c0_i32_0 : i32, i32
  }
  func.func @transform_14(%arg0: i32, %arg1: i32) -> (i32, i32) {
    %c0_i32 = arith.constant 0 : i32
    %c0_i32_0 = arith.constant 0 : i32
    %c0_i32_1 = arith.constant 0 : i32
    return %c0_i32, %c0_i32_0 : i32, i32
  }
  func.func @transform_15(%arg0: i32, %arg1: i32) -> (i32, i32) {
    %c0_i32 = arith.constant 0 : i32
    %c0_i32_0 = arith.constant 0 : i32
    %c0_i32_1 = arith.constant 0 : i32
    return %c0_i32, %c0_i32_0 : i32, i32
  }
  func.func @transform_16(%arg0: i32, %arg1: i32) -> (i32, i32) {
    %c0_i32 = arith.constant 0 : i32
    %c0_i32_0 = arith.constant 0 : i32
    %c0_i32_1 = arith.constant 0 : i32
    return %c0_i32, %c0_i32_0 : i32, i32
  }
  func.func @transform_17(%arg0: i32, %arg1: i32) -> (i32, i32) {
    %c0_i32 = arith.constant 0 : i32
    %c0_i32_0 = arith.constant 0 : i32
    %c0_i32_1 = arith.constant 0 : i32
    return %c0_i32, %c0_i32_0 : i32, i32
  }
  func.func @transform_18(%arg0: i32, %arg1: i32) -> (i32, i32) {
    %c0_i32 = arith.constant 0 : i32
    %c0_i32_0 = arith.constant 0 : i32
    %c0_i32_1 = arith.constant 0 : i32
    return %c0_i32, %c0_i32_0 : i32, i32
  }
  func.func @transform_19(%arg0: i32, %arg1: i32) -> (i32, i32) {
    %c0_i32 = arith.constant 0 : i32
    %c0_i32_0 = arith.constant 0 : i32
    return %arg0, %c0_i32 : i32, i32
  }
  func.func @transform_20(%arg0: i32, %arg1: i32) -> (i32, i32) {
    %c0_i32 = arith.constant 0 : i32
    %c0_i32_0 = arith.constant 0 : i32
    return %arg0, %c0_i32 : i32, i32
  }
}

</mosaic_0001>

<llo_original>
// kernel: tpu_custom_call.1
$region0: #{tpu_custom_call.1}
  #allocation0 [shape = 'u32[]', space=smem, size = 0x4, offset = 0x4, fixed_abs, tag = 'smem constant byte address 0x4 - core index']
  #allocation1 [shape = 'u32[72,128]{1,0:T(1,128)}', space=vmem, size = 0x9000, scoped, tag = 'internal scratch']
  #allocation2 [shape = 'f32[32,128]{1,0:T(8,128)}', space=vmem, size = 0x4000, scoped, tag = 'scratch operand']
  %s0 = inlined_call_operand.hbm [shape: s8[32,32], index: 0, kind: input, shape index: {}]
  %s1 = inlined_call_operand.hbm [shape: bf16[32,128], index: 1, kind: input, shape index: {}]
  %s2 = inlined_call_operand.hbm [shape: f32[32,128], index: 2, kind: input, shape index: {}]
  %s3 = inlined_call_operand.hbm [shape: bf16[32,128], index: 3, kind: input, shape index: {}]
  %s4 = inlined_call_operand.vmem [shape: f32[32,1], index: 4, kind: input, shape index: {}]
  %s5 = inlined_call_operand.vmem [shape: f32[32,1], index: 5, kind: input, shape index: {}]
  %s6 = inlined_call_operand.vmem [shape: f32[32,1], index: 6, kind: input, shape index: {}]
  %s7 = inlined_call_operand.vmem [shape: f32[32,1], index: 7, kind: input, shape index: {}]
  %s8 = inlined_call_operand.vmem [shape: bf16[128,128], index: 8, kind: input, shape index: {}]
  %s9 = inlined_call_operand.vmem [shape: f32[1,128], index: 9, kind: input, shape index: {}]
  %s10 = inlined_call_operand.vmem [shape: bf16[128,128], index: 10, kind: input, shape index: {}]
  %s11 = inlined_call_operand.vmem [shape: f32[1,128], index: 11, kind: input, shape index: {}]
  %s12 = inlined_call_operand.hbm [shape: bf16[128,128], index: 12, kind: input, shape index: {}]
  %s13 = inlined_call_operand.hbm [shape: bf16[128,128], index: 13, kind: input, shape index: {}]
  %s14 = inlined_call_operand.vmem [shape: f32[1,128], index: 14, kind: input, shape index: {}]
  %s15 = inlined_call_operand.hbm [shape: bf16[128,128], index: 15, kind: input, shape index: {}]
  %s16 = inlined_call_operand.hbm [shape: bf16[128,128], index: 16, kind: input, shape index: {}]
  %s17 = inlined_call_operand.hbm [shape: bf16[128,128], index: 17, kind: input, shape index: {}]
  %s18 = inlined_call_operand.vmem [shape: f32[1,128], index: 18, kind: input, shape index: {}]
  %s19 = inlined_call_operand.hbm [shape: bf16[32,128], index: 19, kind: output, shape index: {0}]
  %s20 = inlined_call_operand.hbm [shape: f32[8,128], index: 20, kind: output, shape index: {1}]
  %21 = xla_tuple %s19, %s20
  %s22 = sld [smem:[#allocation0]]
  $region138: #{tpu_custom_call.1} parent=0
    _
  %s24 = ssub.s32 1, %s22
  %s25 = scalar_select 0, %s24, %s22
  $region1: #{tpu_custom_call.1} parent=0
    #allocation3 [shape = 'u8[4096]{0}', space=vmem, size = 0x1000, scoped, tag = 'input window, operand 0, single buffered']
    #allocation4 [shape = 's32[1]{0}', space=sflag, size = 0x4, scoped, tag = 'scoped memory for tpu_custom_call.1']
    #allocation5 [shape = 's32[1]{0}', space=sflag, size = 0x4, scoped, tag = 'scoped memory for tpu_custom_call.1']
    #allocation6 [shape = 'u8[8192]{0}', space=vmem, size = 0x2000, scoped, tag = 'input window, operand 1, single buffered']
    #allocation7 [shape = 's32[1]{0}', space=sflag, size = 0x4, scoped, tag = 'scoped memory for tpu_custom_call.1']
    #allocation8 [shape = 'u8[16384]{0}', space=vmem, size = 0x4000, scoped, tag = 'input window, operand 2, single buffered']
    #allocation9 [shape = 'u8[8192]{0}', space=vmem, size = 0x2000, scoped, tag = 'input window, operand 3, single buffered']
    #allocation10 [shape = 's32[1]{0}', space=sflag, size = 0x4, scoped, tag = 'scoped memory for tpu_custom_call.1']
    #allocation11 [shape = 'u8[32768]{0}', space=vmem, size = 0x8000, scoped, tag = 'input window, operand 12, single buffered']
    #allocation12 [shape = 'u8[32768]{0}', space=vmem, size = 0x8000, scoped, tag = 'input window, operand 13, single buffered']
    #allocation13 [shape = 's32[1]{0}', space=sflag, size = 0x4, scoped, tag = 'scoped memory for tpu_custom_call.1']
    #allocation14 [shape = 'u8[32768]{0}', space=vmem, size = 0x8000, scoped, tag = 'input window, operand 15, single buffered']
    #allocation15 [shape = 'u8[32768]{0}', space=vmem, size = 0x8000, scoped, tag = 'input window, operand 16, single buffered']
    #allocation16 [shape = 's32[1]{0}', space=sflag, size = 0x4, scoped, tag = 'scoped memory for tpu_custom_call.1']
    #allocation17 [shape = 'u8[32768]{0}', space=vmem, size = 0x8000, scoped, tag = 'input window, operand 17, single buffered']
    #allocation18 [shape = 'u8[8192]{0}', space=vmem, size = 0x2000, scoped, tag = 'output window, operand 0, single buffered']
    #allocation19 [shape = 'u8[4096]{0}', space=vmem, size = 0x1000, scoped, tag = 'output window, operand 1, single buffered']
    #allocation20 [shape = 's32[1]{0}', space=sflag, size = 0x4, scoped, tag = 'scoped memory for tpu_custom_call.1']
    %26 = vsyncpa [#allocation4], 0
    %27 = vsyncpa [#allocation7], 0
    %28 = vsyncpa [#allocation10], 0
    %29 = vsyncpa [#allocation13], 0
    %30 = vsyncpa [#allocation16], 0
    %31 = vsyncpa [#allocation5], 0
    %32 = vsyncpa [#allocation20], 0
    // Predicated region
    $region2: #{tpu_custom_call.1} parent=1 // pred_check
      _
    $region3: #{tpu_custom_call.1} parent=1 // pred_check_branch
      %34 = sbr.rel (0) target = $region5
    $region4: #{tpu_custom_call.1} parent=1 // pred_region
      %36 = vsyncadd [#allocation4], 0
      %s38 = sshll.u32 %s0, 4
      %s39 = int_to_ptr.hbm [resolvable:$true] %s38
      %s40 = sshll.u32 [#allocation3], 4
      %s41 = int_to_ptr.vmem [resolvable:$true] %s40
      %43 = dma.hbm_to_vmem [thread:$0]  %s39, 128, %s41, [#allocation4]
    $region5: #{tpu_custom_call.1} parent=1 // pred_fallthru
      _
    // Predicated region
    $region6: #{tpu_custom_call.1} parent=1 // pred_check
      _
    $region7: #{tpu_custom_call.1} parent=1 // pred_check_branch
      %45 = sbr.rel (0) target = $region9
    $region8: #{tpu_custom_call.1} parent=1 // pred_region
      %47 = vsyncadd [#allocation7], 0
      %s48 = sshll.u32 %s1, 4
      %s49 = int_to_ptr.hbm [resolvable:$true] %s48
      %s50 = sshll.u32 [#allocation6], 4
      %s51 = int_to_ptr.vmem [resolvable:$true] %s50
      %56 = dma.hbm_to_vmem [thread:$0]  %s49, 256, %s51, [#allocation7], 64, 64, 4
    $region9: #{tpu_custom_call.1} parent=1 // pred_fallthru
      _
    // Predicated region
    $region10: #{tpu_custom_call.1} parent=1 // pred_check
      _
    $region11: #{tpu_custom_call.1} parent=1 // pred_check_branch
      %58 = sbr.rel (0) target = $region13
    $region12: #{tpu_custom_call.1} parent=1 // pred_region
      %60 = vsyncadd [#allocation7], 0
      %s61 = sshll.u32 %s2, 4
      %s62 = int_to_ptr.hbm [resolvable:$true] %s61
      %s63 = sshll.u32 [#allocation8], 4
      %s64 = int_to_ptr.vmem [resolvable:$true] %s63
      %69 = dma.hbm_to_vmem [thread:$0]  %s62, 512, %s64, [#allocation7], 128, 128, 8
    $region13: #{tpu_custom_call.1} parent=1 // pred_fallthru
      _
    // Predicated region
    $region14: #{tpu_custom_call.1} parent=1 // pred_check
      _
    $region15: #{tpu_custom_call.1} parent=1 // pred_check_branch
      %71 = sbr.rel (0) target = $region17
    $region16: #{tpu_custom_call.1} parent=1 // pred_region
      %73 = vsyncadd [#allocation10], 0
      %s74 = sshll.u32 %s3, 4
      %s75 = int_to_ptr.hbm [resolvable:$true] %s74
      %s76 = sshll.u32 [#allocation9], 4
      %s77 = int_to_ptr.vmem [resolvable:$true] %s76
      %82 = dma.hbm_to_vmem [thread:$0]  %s75, 256, %s77, [#allocation10], 64, 64, 4
    $region17: #{tpu_custom_call.1} parent=1 // pred_fallthru
      _
    // Predicated region
    $region18: #{tpu_custom_call.1} parent=1 // pred_check
      _
    $region19: #{tpu_custom_call.1} parent=1 // pred_check_branch
      %84 = sbr.rel (0) target = $region21
    $region20: #{tpu_custom_call.1} parent=1 // pred_region
      _
    $region21: #{tpu_custom_call.1} parent=1 // pred_fallthru
      _
    // Predicated region
    $region22: #{tpu_custom_call.1} parent=1 // pred_check
      _
    $region23: #{tpu_custom_call.1} parent=1 // pred_check_branch
      %86 = sbr.rel (0) target = $region25
    $region24: #{tpu_custom_call.1} parent=1 // pred_region
      _
    $region25: #{tpu_custom_call.1} parent=1 // pred_fallthru
      _
    // Predicated region
    $region26: #{tpu_custom_call.1} parent=1 // pred_check
      _
    $region27: #{tpu_custom_call.1} parent=1 // pred_check_branch
      %88 = sbr.rel (0) target = $region29
    $region28: #{tpu_custom_call.1} parent=1 // pred_region
      _
    $region29: #{tpu_custom_call.1} parent=1 // pred_fallthru
      _
    // Predicated region
    $region30: #{tpu_custom_call.1} parent=1 // pred_check
      _
    $region31: #{tpu_custom_call.1} parent=1 // pred_check_branch
      %90 = sbr.rel (0) target = $region33
    $region32: #{tpu_custom_call.1} parent=1 // pred_region
      _
    $region33: #{tpu_custom_call.1} parent=1 // pred_fallthru
      _
    // Predicated region
    $region34: #{tpu_custom_call.1} parent=1 // pred_check
      _
    $region35: #{tpu_custom_call.1} parent=1 // pred_check_branch
      %92 = sbr.rel (0) target = $region37
    $region36: #{tpu_custom_call.1} parent=1 // pred_region
      _
    $region37: #{tpu_custom_call.1} parent=1 // pred_fallthru
      _
    // Predicated region
    $region38: #{tpu_custom_call.1} parent=1 // pred_check
      _
    $region39: #{tpu_custom_call.1} parent=1 // pred_check_branch
      %94 = sbr.rel (0) target = $region41
    $region40: #{tpu_custom_call.1} parent=1 // pred_region
      _
    $region41: #{tpu_custom_call.1} parent=1 // pred_fallthru
      _
    // Predicated region
    $region42: #{tpu_custom_call.1} parent=1 // pred_check
      _
    $region43: #{tpu_custom_call.1} parent=1 // pred_check_branch
      %96 = sbr.rel (0) target = $region45
    $region44: #{tpu_custom_call.1} parent=1 // pred_region
      _
    $region45: #{tpu_custom_call.1} parent=1 // pred_fallthru
      _
    // Predicated region
    $region46: #{tpu_custom_call.1} parent=1 // pred_check
      _
    $region47: #{tpu_custom_call.1} parent=1 // pred_check_branch
      %98 = sbr.rel (0) target = $region49
    $region48: #{tpu_custom_call.1} parent=1 // pred_region
      _
    $region49: #{tpu_custom_call.1} parent=1 // pred_fallthru
      _
    // Predicated region
    $region50: #{tpu_custom_call.1} parent=1 // pred_check
      _
    $region51: #{tpu_custom_call.1} parent=1 // pred_check_branch
      %100 = sbr.rel (0) target = $region53
    $region52: #{tpu_custom_call.1} parent=1 // pred_region
      %102 = vsyncadd [#allocation10], 0
      %s103 = sshll.u32 %s12, 4
      %s104 = int_to_ptr.hbm [resolvable:$true] %s103
      %s105 = sshll.u32 [#allocation11], 4
      %s106 = int_to_ptr.vmem [resolvable:$true] %s105
      %111 = dma.hbm_to_vmem [thread:$0]  %s104, 1024, %s106, [#allocation10], 64, 64, 4
    $region53: #{tpu_custom_call.1} parent=1 // pred_fallthru
      _
    // Predicated region
    $region54: #{tpu_custom_call.1} parent=1 // pred_check
      _
    $region55: #{tpu_custom_call.1} parent=1 // pred_check_branch
      %113 = sbr.rel (0) target = $region57
    $region56: #{tpu_custom_call.1} parent=1 // pred_region
      %115 = vsyncadd [#allocation13], 0
      %s116 = sshll.u32 %s13, 4
      %s117 = int_to_ptr.hbm [resolvable:$true] %s116
      %s118 = sshll.u32 [#allocation12], 4
      %s119 = int_to_ptr.vmem [resolvable:$true] %s118
      %124 = dma.hbm_to_vmem [thread:$0]  %s117, 1024, %s119, [#allocation13], 64, 64, 4
    $region57: #{tpu_custom_call.1} parent=1 // pred_fallthru
      _
    // Predicated region
    $region58: #{tpu_custom_call.1} parent=1 // pred_check
      _
    $region59: #{tpu_custom_call.1} parent=1 // pred_check_branch
      %126 = sbr.rel (0) target = $region61
    $region60: #{tpu_custom_call.1} parent=1 // pred_region
      _
    $region61: #{tpu_custom_call.1} parent=1 // pred_fallthru
      _
    // Predicated region
    $region62: #{tpu_custom_call.1} parent=1 // pred_check
      _
    $region63: #{tpu_custom_call.1} parent=1 // pred_check_branch
      %128 = sbr.rel (0) target = $region65
    $region64: #{tpu_custom_call.1} parent=1 // pred_region
      %130 = vsyncadd [#allocation13], 0
      %s131 = sshll.u32 %s15, 4
      %s132 = int_to_ptr.hbm [resolvable:$true] %s131
      %s133 = sshll.u32 [#allocation14], 4
      %s134 = int_to_ptr.vmem [resolvable:$true] %s133
      %139 = dma.hbm_to_vmem [thread:$0]  %s132, 1024, %s134, [#allocation13], 64, 64, 4
    $region65: #{tpu_custom_call.1} parent=1 // pred_fallthru
      _
    // Predicated region
    $region66: #{tpu_custom_call.1} parent=1 // pred_check
      _
    $region67: #{tpu_custom_call.1} parent=1 // pred_check_branch
      %141 = sbr.rel (0) target = $region69
    $region68: #{tpu_custom_call.1} parent=1 // pred_region
      %143 = vsyncadd [#allocation16], 0
      %s144 = sshll.u32 %s16, 4
      %s145 = int_to_ptr.hbm [resolvable:$true] %s144
      %s146 = sshll.u32 [#allocation15], 4
      %s147 = int_to_ptr.vmem [resolvable:$true] %s146
      %152 = dma.hbm_to_vmem [thread:$0]  %s145, 1024, %s147, [#allocation16], 64, 64, 4
    $region69: #{tpu_custom_call.1} parent=1 // pred_fallthru
      _
    // Predicated region
    $region70: #{tpu_custom_call.1} parent=1 // pred_check
      _
    $region71: #{tpu_custom_call.1} parent=1 // pred_check_branch
      %154 = sbr.rel (0) target = $region73
    $region72: #{tpu_custom_call.1} parent=1 // pred_region
      %156 = vsyncadd [#allocation16], 0
      %s157 = sshll.u32 %s17, 4
      %s158 = int_to_ptr.hbm [resolvable:$true] %s157
      %s159 = sshll.u32 [#allocation17], 4
      %s160 = int_to_ptr.vmem [resolvable:$true] %s159
      %165 = dma.hbm_to_vmem [thread:$0]  %s158, 1024, %s160, [#allocation16], 64, 64, 4
    $region73: #{tpu_custom_call.1} parent=1 // pred_fallthru
      _
    // Predicated region
    $region74: #{tpu_custom_call.1} parent=1 // pred_check
      _
    $region75: #{tpu_custom_call.1} parent=1 // pred_check_branch
      %167 = sbr.rel (0) target = $region77
    $region76: #{tpu_custom_call.1} parent=1 // pred_region
      _
    $region77: #{tpu_custom_call.1} parent=1 // pred_fallthru
      _
    // Predicated region
    $region78: #{tpu_custom_call.1} parent=1 // pred_check
      _
    $region79: #{tpu_custom_call.1} parent=1 // pred_check_branch
      %169 = sbr.rel (0) target = $region81
    $region80: #{tpu_custom_call.1} parent=1 // pred_region
      %171 = dma.done [#allocation4], 128
    $region81: #{tpu_custom_call.1} parent=1 // pred_fallthru
      _
    // Predicated region
    $region82: #{tpu_custom_call.1} parent=1 // pred_check
      _
    $region83: #{tpu_custom_call.1} parent=1 // pred_check_branch
      %173 = sbr.rel (0) target = $region85
    $region84: #{tpu_custom_call.1} parent=1 // pred_region
      %175 = dma.done [#allocation7], 256
    $region85: #{tpu_custom_call.1} parent=1 // pred_fallthru
      _
    // Predicated region
    $region86: #{tpu_custom_call.1} parent=1 // pred_check
      _
    $region87: #{tpu_custom_call.1} parent=1 // pred_check_branch
      %177 = sbr.rel (0) target = $region89
    $region88: #{tpu_custom_call.1} parent=1 // pred_region
      %179 = dma.done [#allocation7], 512
    $region89: #{tpu_custom_call.1} parent=1 // pred_fallthru
      _
    // Predicated region
    $region90: #{tpu_custom_call.1} parent=1 // pred_check
      _
    $region91: #{tpu_custom_call.1} parent=1 // pred_check_branch
      %181 = sbr.rel (0) target = $region93
    $region92: #{tpu_custom_call.1} parent=1 // pred_region
      %183 = dma.done [#allocation10], 256
    $region93: #{tpu_custom_call.1} parent=1 // pred_fallthru
      _
    // Predicated region
    $region94: #{tpu_custom_call.1} parent=1 // pred_check
      _
    $region95: #{tpu_custom_call.1} parent=1 // pred_check_branch
      %185 = sbr.rel (0) target = $region97
    $region96: #{tpu_custom_call.1} parent=1 // pred_region
      %187 = dma.done [#allocation10], 1024
    $region97: #{tpu_custom_call.1} parent=1 // pred_fallthru
      _
    // Predicated region
    $region98: #{tpu_custom_call.1} parent=1 // pred_check
      _
    $region99: #{tpu_custom_call.1} parent=1 // pred_check_branch
      %189 = sbr.rel (0) target = $region101
    $region100: #{tpu_custom_call.1} parent=1 // pred_region
      %191 = dma.done [#allocation13], 1024
    $region101: #{tpu_custom_call.1} parent=1 // pred_fallthru
      _
    // Predicated region
    $region102: #{tpu_custom_call.1} parent=1 // pred_check
      _
    $region103: #{tpu_custom_call.1} parent=1 // pred_check_branch
      %193 = sbr.rel (0) target = $region105
    $region104: #{tpu_custom_call.1} parent=1 // pred_region
      %195 = dma.done [#allocation13], 1024
    $region105: #{tpu_custom_call.1} parent=1 // pred_fallthru
      _
    // Predicated region
    $region106: #{tpu_custom_call.1} parent=1 // pred_check
      _
    $region107: #{tpu_custom_call.1} parent=1 // pred_check_branch
      %197 = sbr.rel (0) target = $region109
    $region108: #{tpu_custom_call.1} parent=1 // pred_region
      %199 = dma.done [#allocation16], 1024
    $region109: #{tpu_custom_call.1} parent=1 // pred_fallthru
      _
    // Predicated region
    $region110: #{tpu_custom_call.1} parent=1 // pred_check
      _
    $region111: #{tpu_custom_call.1} parent=1 // pred_check_branch
      %201 = sbr.rel (0) target = $region113
    $region112: #{tpu_custom_call.1} parent=1 // pred_region
      %203 = dma.done [#allocation16], 1024
    $region113: #{tpu_custom_call.1} parent=1 // pred_fallthru
      _
    %p205 = scmp.eq.s32.totalorder 0, 0
    // Predicated region
    $region114: #{tpu_custom_call.1} parent=1 // pred_check
      %p206 = pneg %p205
    $region115: #{tpu_custom_call.1} parent=1 // pred_check_branch
      %208 = sbr.rel (%p206) target = $region117
    $region116: #{tpu_custom_call.1} parent=1 // pred_region
      %209 = vst [vmem:[#allocation2] sm:$0xff] 0.0
      %210 = vst [vmem:[#allocation2 + $0x8] sm:$0xff] 0.0
      %211 = vst [vmem:[#allocation2 + $0x10] sm:$0xff] 0.0
      %212 = vst [vmem:[#allocation2 + $0x18] sm:$0xff] 0.0
    $region117: #{tpu_custom_call.1} parent=1 // pred_fallthru
      _
    %s213 = smul.u32 0, 32
    %v214 = vld [vmem:[#allocation2] sm:$0xff]
    %v215 = vld [vmem:[#allocation2 + $0x8] sm:$0xff]
    %v216 = vld [vmem:[#allocation2 + $0x10] sm:$0xff]
    %v217 = vld [vmem:[#allocation2 + $0x18] sm:$0xff]
    %v218 = vld [vmem:[#allocation3] sm:$0xff]
    %v219 = vunpack.c.0.s8 %v218
    %v220 = vunpack.c.1.s8 %v218
    %v221 = vunpack.c.2.s8 %v218
    %v222 = vunpack.c.3.s8 %v218
    %v223 = vcvt.s32.f32 %v219
    %v224 = vcvt.s32.f32 %v220
    %v225 = vcvt.s32.f32 %v221
    %v226 = vcvt.s32.f32 %v222
    %v227 = vpack.c.bf16 %v224, %v223
    %v228 = vpack.c.bf16 %v226, %v225
    %s229 = sshra.s32 %s213, 3
    %s230 = sand.u32 %s213, 7
    %s231 = smul.addr %s229, 4
    %s232 = scalar_lea.vmem [#allocation6], %s231
    %v233 = vld [vmem:[%s232] sm:$0xf]
    %v234 = vld [vmem:[%s232 + $0x4] sm:$0xf]
    %v235 = vld [vmem:[%s232 + $0x8] sm:$0xf]
    %v236 = vld [vmem:[%s232 + $0xc] sm:$0xf]
    %v241 = vunpack.c.l.b16 %v233
    %v242 = vunpack.c.l.b16 %v234
    %v243 = vunpack.c.l.b16 %v235
    %v244 = vunpack.c.l.b16 %v236
    %v245 = vpack.c.b16 %v242, %v241
    %v246 = vpack.c.b16 %v244, %v243
    %vm249 = vcmask 261120
    %v251 = vsel %vm249, %v227, 0
    %v254 = vsel %vm249, %v228, 0
    %256 = vmatpush.bf16.msra.mxu0 0
    %257 = vmatpush.bf16.msra.mxu0 0
    %258 = vmatpush.bf16.msra.mxu0 0
    %259 = vmatpush.bf16.msra.mxu0 0
    %260 = vmatpush.bf16.msra.mxu0 0
    %261 = vmatpush.bf16.msra.mxu0 0
    %262 = vmatpush.bf16.msra.mxu0 %v246
    %263 = vmatpush.bf16.msra.mxu0 %v245
    %264 = vmatmul.bf16.gmra.mxu0 %v251
    %v265 = vpop.f32.mrf.mxu0
    %v266 = vadd.f32 0.0, %v265
    %v267 = vpop.f32.mrf.mxu0
    %v268 = vadd.f32 0.0, %v267
    %269 = vmatmul.bf16.gmra.mxu0 %v254
    %v270 = vpop.f32.mrf.mxu0
    %v271 = vadd.f32 0.0, %v270
    %v272 = vpop.f32.mrf.mxu0
    %v273 = vadd.f32 0.0, %v272
    %274 = vdwg.mxu0
    %v275 = vadd.f32 %v214, %v266
    %v276 = vadd.f32 %v215, %v268
    %v277 = vadd.f32 %v216, %v271
    %v278 = vadd.f32 %v217, %v273
    %279 = vst [vmem:[#allocation2] sm:$0xff] %v275
    %280 = vst [vmem:[#allocation2 + $0x8] sm:$0xff] %v276
    %281 = vst [vmem:[#allocation2 + $0x10] sm:$0xff] %v277
    %282 = vst [vmem:[#allocation2 + $0x18] sm:$0xff] %v278
    // Predicated region
    $region118: #{tpu_custom_call.1} parent=1 // pred_check
      %p283 = pneg %p205
    $region119: #{tpu_custom_call.1} parent=1 // pred_check_branch
      %285 = sbr.rel (%p283) target = $region121
    $region120: #{tpu_custom_call.1} parent=1 // pred_region
      %v286 = vld [vmem:[#allocation8] sm:$0xff]
      %v287 = vld [vmem:[#allocation8 + $0x8] sm:$0xff]
      %v288 = vld [vmem:[#allocation8 + $0x10] sm:$0xff]
      %v289 = vld [vmem:[#allocation8 + $0x18] sm:$0xff]
      %v290 = vpack.c.bf16 %v287, %v286
      %v291 = vpack.c.bf16 %v289, %v288
      %v292 = vld [vmem:[#allocation2] sm:$0xff]
      %v293 = vld [vmem:[#allocation2 + $0x8] sm:$0xff]
      %v294 = vld [vmem:[#allocation2 + $0x10] sm:$0xff]
      %v295 = vld [vmem:[#allocation2 + $0x18] sm:$0xff]
      %v296 = vpack.c.bf16 %v293, %v292
      %v297 = vpack.c.bf16 %v295, %v294
      %v298 = vld [vmem:[%s8] sm:$0xf]
      %v299 = vld [vmem:[%s8 + $0x4] sm:$0xf]
      %v300 = vld [vmem:[%s8 + $0x8] sm:$0xf]
      %v301 = vld [vmem:[%s8 + $0xc] sm:$0xf]
      %v302 = vld [vmem:[%s8 + $0x10] sm:$0xf]
      %v303 = vld [vmem:[%s8 + $0x14] sm:$0xf]
      %v304 = vld [vmem:[%s8 + $0x18] sm:$0xf]
      %v305 = vld [vmem:[%s8 + $0x1c] sm:$0xf]
      %v306 = vld [vmem:[%s8 + $0x20] sm:$0xf]
      %v307 = vld [vmem:[%s8 + $0x24] sm:$0xf]
      %v308 = vld [vmem:[%s8 + $0x28] sm:$0xf]
      %v309 = vld [vmem:[%s8 + $0x2c] sm:$0xf]
      %v310 = vld [vmem:[%s8 + $0x30] sm:$0xf]
      %v311 = vld [vmem:[%s8 + $0x34] sm:$0xf]
      %v312 = vld [vmem:[%s8 + $0x38] sm:$0xf]
      %v313 = vld [vmem:[%s8 + $0x3c] sm:$0xf]
      %v314 = vld [vmem:[%s6] sm:$0xff]
      %v315 = vld [vmem:[%s6 + $0x8] sm:$0xff]
      %v316 = vld [vmem:[%s6 + $0x10] sm:$0xff]
      %v317 = vld [vmem:[%s6 + $0x18] sm:$0xff]
      %v318 = vld [vmem:[%s9] sm:$0x1]
      %320 = vset.pattern.permute.xlu0 0
      %321 = vperm.xlu0 %320, %v314
      %v322 = vpop.permute.xlu0 %321
      %325 = vset.pattern.permute.xlu0 0
      %326 = vperm.xlu0 %325, %v315
      %v327 = vpop.permute.xlu0 %326
      %330 = vset.pattern.permute.xlu0 0
      %331 = vperm.xlu0 %330, %v316
      %v332 = vpop.permute.xlu0 %331
      %335 = vset.pattern.permute.xlu0 0
      %336 = vperm.xlu0 %335, %v317
      %v337 = vpop.permute.xlu0 %336
      %v340 = vperm.slane %v318, 0
      %v342 = vmul.f32 %v322, %v340
      %v343 = vmul.f32 %v327, %v340
      %v344 = vmul.f32 %v332, %v340
      %v345 = vmul.f32 %v337, %v340
      %v362 = vunpack.c.l.b16 %v298
      %v363 = vunpack.c.l.b16 %v299
      %v364 = vunpack.c.l.b16 %v300
      %v365 = vunpack.c.l.b16 %v301
      %v366 = vunpack.c.l.b16 %v302
      %v367 = vunpack.c.l.b16 %v303
      %v368 = vunpack.c.l.b16 %v304
      %v369 = vunpack.c.l.b16 %v305
      %v370 = vunpack.c.l.b16 %v306
      %v371 = vunpack.c.l.b16 %v307
      %v372 = vunpack.c.l.b16 %v308
      %v373 = vunpack.c.l.b16 %v309
      %v374 = vunpack.c.l.b16 %v310
      %v375 = vunpack.c.l.b16 %v311
      %v376 = vunpack.c.l.b16 %v312
      %v377 = vunpack.c.l.b16 %v313
      %v378 = vpack.c.b16 %v363, %v362
      %v379 = vpack.c.b16 %v365, %v364
      %v380 = vpack.c.b16 %v367, %v366
      %v381 = vpack.c.b16 %v369, %v368
      %v382 = vpack.c.b16 %v371, %v370
      %v383 = vpack.c.b16 %v373, %v372
      %v384 = vpack.c.b16 %v375, %v374
      %v385 = vpack.c.b16 %v377, %v376
      %394 = vmatpush.bf16.msra.mxu0 %v385
      %395 = vmatpush.bf16.msra.mxu0 %v384
      %396 = vmatpush.bf16.msra.mxu0 %v383
      %397 = vmatpush.bf16.msra.mxu0 %v382
      %398 = vmatpush.bf16.msra.mxu0 %v381
      %399 = vmatpush.bf16.msra.mxu0 %v380
      %400 = vmatpush.bf16.msra.mxu0 %v379
      %401 = vmatpush.bf16.msra.mxu0 %v378
      %402 = vmatmul.bf16.gmra.mxu0 %v296
      %v403 = vpop.f32.mrf.mxu0
      %v404 = vadd.f32 %v342, %v403
      %v405 = vpop.f32.mrf.mxu0
      %v406 = vadd.f32 %v343, %v405
      %407 = vmatmul.bf16.gmra.mxu0 %v297
      %v408 = vpop.f32.mrf.mxu0
      %v409 = vadd.f32 %v344, %v408
      %v410 = vpop.f32.mrf.mxu0
      %v411 = vadd.f32 %v345, %v410
      %412 = vdwg.mxu0
      %v413 = vld [vmem:[#allocation9] sm:$0xf]
      %v414 = vld [vmem:[#allocation9 + $0x4] sm:$0xf]
      %v415 = vld [vmem:[#allocation9 + $0x8] sm:$0xf]
      %v416 = vld [vmem:[#allocation9 + $0xc] sm:$0xf]
      %v417 = vld [vmem:[%s10] sm:$0xf]
      %v418 = vld [vmem:[%s10 + $0x4] sm:$0xf]
      %v419 = vld [vmem:[%s10 + $0x8] sm:$0xf]
      %v420 = vld [vmem:[%s10 + $0xc] sm:$0xf]
      %v421 = vld [vmem:[%s10 + $0x10] sm:$0xf]
      %v422 = vld [vmem:[%s10 + $0x14] sm:$0xf]
      %v423 = vld [vmem:[%s10 + $0x18] sm:$0xf]
      %v424 = vld [vmem:[%s10 + $0x1c] sm:$0xf]
      %v425 = vld [vmem:[%s10 + $0x20] sm:$0xf]
      %v426 = vld [vmem:[%s10 + $0x24] sm:$0xf]
      %v427 = vld [vmem:[%s10 + $0x28] sm:$0xf]
      %v428 = vld [vmem:[%s10 + $0x2c] sm:$0xf]
      %v429 = vld [vmem:[%s10 + $0x30] sm:$0xf]
      %v430 = vld [vmem:[%s10 + $0x34] sm:$0xf]
      %v431 = vld [vmem:[%s10 + $0x38] sm:$0xf]
      %v432 = vld [vmem:[%s10 + $0x3c] sm:$0xf]
      %v433 = vld [vmem:[%s5] sm:$0xff]
      %v434 = vld [vmem:[%s5 + $0x8] sm:$0xff]
      %v435 = vld [vmem:[%s5 + $0x10] sm:$0xff]
      %v436 = vld [vmem:[%s5 + $0x18] sm:$0xff]
      %v437 = vld [vmem:[%s11] sm:$0x1]
      %439 = vset.pattern.permute.xlu0 0
      %440 = vperm.xlu0 %439, %v433
      %v441 = vpop.permute.xlu0 %440
      %444 = vset.pattern.permute.xlu0 0
      %445 = vperm.xlu0 %444, %v434
      %v446 = vpop.permute.xlu0 %445
      %449 = vset.pattern.permute.xlu0 0
      %450 = vperm.xlu0 %449, %v435
      %v451 = vpop.permute.xlu0 %450
      %454 = vset.pattern.permute.xlu0 0
      %455 = vperm.xlu0 %454, %v436
      %v456 = vpop.permute.xlu0 %455
      %v459 = vperm.slane %v437, 0
      %v461 = vmul.f32 %v441, %v459
      %v462 = vmul.f32 %v446, %v459
      %v463 = vmul.f32 %v451, %v459
      %v464 = vmul.f32 %v456, %v459
      %v469 = vunpack.c.l.b16 %v413
      %v470 = vunpack.c.l.b16 %v414
      %v471 = vunpack.c.l.b16 %v415
      %v472 = vunpack.c.l.b16 %v416
      %v473 = vpack.c.b16 %v470, %v469
      %v474 = vpack.c.b16 %v472, %v471
      %v493 = vunpack.c.l.b16 %v417
      %v494 = vunpack.c.l.b16 %v418
      %v495 = vunpack.c.l.b16 %v419
      %v496 = vunpack.c.l.b16 %v420
      %v497 = vunpack.c.l.b16 %v421
      %v498 = vunpack.c.l.b16 %v422
      %v499 = vunpack.c.l.b16 %v423
      %v500 = vunpack.c.l.b16 %v424
      %v501 = vunpack.c.l.b16 %v425
      %v502 = vunpack.c.l.b16 %v426
      %v503 = vunpack.c.l.b16 %v427
      %v504 = vunpack.c.l.b16 %v428
      %v505 = vunpack.c.l.b16 %v429
      %v506 = vunpack.c.l.b16 %v430
      %v507 = vunpack.c.l.b16 %v431
      %v508 = vunpack.c.l.b16 %v432
      %v509 = vpack.c.b16 %v494, %v493
      %v510 = vpack.c.b16 %v496, %v495
      %v511 = vpack.c.b16 %v498, %v497
      %v512 = vpack.c.b16 %v500, %v499
      %v513 = vpack.c.b16 %v502, %v501
      %v514 = vpack.c.b16 %v504, %v503
      %v515 = vpack.c.b16 %v506, %v505
      %v516 = vpack.c.b16 %v508, %v507
      %525 = vmatpush.bf16.msra.mxu0 %v516
      %526 = vmatpush.bf16.msra.mxu0 %v515
      %527 = vmatpush.bf16.msra.mxu0 %v514
      %528 = vmatpush.bf16.msra.mxu0 %v513
      %529 = vmatpush.bf16.msra.mxu0 %v512
      %530 = vmatpush.bf16.msra.mxu0 %v511
      %531 = vmatpush.bf16.msra.mxu0 %v510
      %532 = vmatpush.bf16.msra.mxu0 %v509
      %533 = vmatmul.bf16.gmra.mxu0 %v473
      %v534 = vpop.f32.mrf.mxu0
      %v535 = vadd.f32 %v461, %v534
      %v536 = vpop.f32.mrf.mxu0
      %v537 = vadd.f32 %v462, %v536
      %538 = vmatmul.bf16.gmra.mxu0 %v474
      %v539 = vpop.f32.mrf.mxu0
      %v540 = vadd.f32 %v463, %v539
      %v541 = vpop.f32.mrf.mxu0
      %v542 = vadd.f32 %v464, %v541
      %543 = vdwg.mxu0
      %v544 = vadd.f32 %v286, %v535
      %v545 = vadd.f32 %v287, %v537
      %v546 = vadd.f32 %v288, %v540
      %v547 = vadd.f32 %v289, %v542
      %v548 = vld [vmem:[%s4] sm:$0xff]
      %v549 = vld [vmem:[%s4 + $0x8] sm:$0xff]
      %v550 = vld [vmem:[%s4 + $0x10] sm:$0xff]
      %v551 = vld [vmem:[%s4 + $0x18] sm:$0xff]
      %553 = vset.pattern.permute.xlu0 0
      %554 = vperm.xlu0 %553, %v548
      %v555 = vpop.permute.xlu0 %554
      %558 = vset.pattern.permute.xlu0 0
      %559 = vperm.xlu0 %558, %v549
      %v560 = vpop.permute.xlu0 %559
      %563 = vset.pattern.permute.xlu0 0
      %564 = vperm.xlu0 %563, %v550
      %v565 = vpop.permute.xlu0 %564
      %568 = vset.pattern.permute.xlu0 0
      %569 = vperm.xlu0 %568, %v551
      %v570 = vpop.permute.xlu0 %569
      %v572 = vmul.f32 %v544, %v555
      %v573 = vmul.f32 %v545, %v560
      %v574 = vmul.f32 %v546, %v565
      %v575 = vmul.f32 %v547, %v570
      %v576 = vld [vmem:[#allocation11] sm:$0xf]
      %v577 = vld [vmem:[#allocation11 + $0x4] sm:$0xf]
      %v578 = vld [vmem:[#allocation11 + $0x8] sm:$0xf]
      %v579 = vld [vmem:[#allocation11 + $0xc] sm:$0xf]
      %v580 = vld [vmem:[#allocation11 + $0x10] sm:$0xf]
      %v581 = vld [vmem:[#allocation11 + $0x14] sm:$0xf]
      %v582 = vld [vmem:[#allocation11 + $0x18] sm:$0xf]
      %v583 = vld [vmem:[#allocation11 + $0x1c] sm:$0xf]
      %v584 = vld [vmem:[#allocation11 + $0x20] sm:$0xf]
      %v585 = vld [vmem:[#allocation11 + $0x24] sm:$0xf]
      %v586 = vld [vmem:[#allocation11 + $0x28] sm:$0xf]
      %v587 = vld [vmem:[#allocation11 + $0x2c] sm:$0xf]
      %v588 = vld [vmem:[#allocation11 + $0x30] sm:$0xf]
      %v589 = vld [vmem:[#allocation11 + $0x34] sm:$0xf]
      %v590 = vld [vmem:[#allocation11 + $0x38] sm:$0xf]
      %v591 = vld [vmem:[#allocation11 + $0x3c] sm:$0xf]
      %v592 = vpack.c.bf16 %v573, %v572
      %v593 = vpack.c.bf16 %v575, %v574
      %v594 = vld [vmem:[#allocation12] sm:$0xf]
      %v595 = vld [vmem:[#allocation12 + $0x4] sm:$0xf]
      %v596 = vld [vmem:[#allocation12 + $0x8] sm:$0xf]
      %v597 = vld [vmem:[#allocation12 + $0xc] sm:$0xf]
      %v598 = vld [vmem:[#allocation12 + $0x10] sm:$0xf]
      %v599 = vld [vmem:[#allocation12 + $0x14] sm:$0xf]
      %v600 = vld [vmem:[#allocation12 + $0x18] sm:$0xf]
      %v601 = vld [vmem:[#allocation12 + $0x1c] sm:$0xf]
      %v602 = vld [vmem:[#allocation12 + $0x20] sm:$0xf]
      %v603 = vld [vmem:[#allocation12 + $0x24] sm:$0xf]
      %v604 = vld [vmem:[#allocation12 + $0x28] sm:$0xf]
      %v605 = vld [vmem:[#allocation12 + $0x2c] sm:$0xf]
      %v606 = vld [vmem:[#allocation12 + $0x30] sm:$0xf]
      %v607 = vld [vmem:[#allocation12 + $0x34] sm:$0xf]
      %v608 = vld [vmem:[#allocation12 + $0x38] sm:$0xf]
      %v609 = vld [vmem:[#allocation12 + $0x3c] sm:$0xf]
      %v626 = vunpack.c.l.b16 %v594
      %v627 = vunpack.c.l.b16 %v595
      %v628 = vunpack.c.l.b16 %v596
      %v629 = vunpack.c.l.b16 %v597
      %v630 = vunpack.c.l.b16 %v598
      %v631 = vunpack.c.l.b16 %v599
      %v632 = vunpack.c.l.b16 %v600
      %v633 = vunpack.c.l.b16 %v601
      %v634 = vunpack.c.l.b16 %v602
      %v635 = vunpack.c.l.b16 %v603
      %v636 = vunpack.c.l.b16 %v604
      %v637 = vunpack.c.l.b16 %v605
      %v638 = vunpack.c.l.b16 %v606
      %v639 = vunpack.c.l.b16 %v607
      %v640 = vunpack.c.l.b16 %v608
      %v641 = vunpack.c.l.b16 %v609
      %v642 = vpack.c.b16 %v627, %v626
      %v643 = vpack.c.b16 %v629, %v628
      %v644 = vpack.c.b16 %v631, %v630
      %v645 = vpack.c.b16 %v633, %v632
      %v646 = vpack.c.b16 %v635, %v634
      %v647 = vpack.c.b16 %v637, %v636
      %v648 = vpack.c.b16 %v639, %v638
      %v649 = vpack.c.b16 %v641, %v640
      %658 = vmatpush.bf16.msra.mxu0 %v649
      %659 = vmatpush.bf16.msra.mxu0 %v648
      %660 = vmatpush.bf16.msra.mxu0 %v647
      %661 = vmatpush.bf16.msra.mxu0 %v646
      %662 = vmatpush.bf16.msra.mxu0 %v645
      %663 = vmatpush.bf16.msra.mxu0 %v644
      %664 = vmatpush.bf16.msra.mxu0 %v643
      %665 = vmatpush.bf16.msra.mxu0 %v642
      %666 = vmatmul.bf16.gmra.mxu0 %v592
      %v667 = vpop.f32.mrf.mxu0
      %v668 = vadd.f32 0.0, %v667
      %v669 = vpop.f32.mrf.mxu0
      %v670 = vadd.f32 0.0, %v669
      %671 = vmatmul.bf16.gmra.mxu0 %v593
      %v672 = vpop.f32.mrf.mxu0
      %v673 = vadd.f32 0.0, %v672
      %v674 = vpop.f32.mrf.mxu0
      %v675 = vadd.f32 0.0, %v674
      %676 = vdwg.mxu0
      %v693 = vunpack.c.l.b16 %v576
      %v694 = vunpack.c.l.b16 %v577
      %v695 = vunpack.c.l.b16 %v578
      %v696 = vunpack.c.l.b16 %v579
      %v697 = vunpack.c.l.b16 %v580
      %v698 = vunpack.c.l.b16 %v581
      %v699 = vunpack.c.l.b16 %v582
      %v700 = vunpack.c.l.b16 %v583
      %v701 = vunpack.c.l.b16 %v584
      %v702 = vunpack.c.l.b16 %v585
      %v703 = vunpack.c.l.b16 %v586
      %v704 = vunpack.c.l.b16 %v587
      %v705 = vunpack.c.l.b16 %v588
      %v706 = vunpack.c.l.b16 %v589
      %v707 = vunpack.c.l.b16 %v590
      %v708 = vunpack.c.l.b16 %v591
      %v709 = vpack.c.b16 %v694, %v693
      %v710 = vpack.c.b16 %v696, %v695
      %v711 = vpack.c.b16 %v698, %v697
      %v712 = vpack.c.b16 %v700, %v699
      %v713 = vpack.c.b16 %v702, %v701
      %v714 = vpack.c.b16 %v704, %v703
      %v715 = vpack.c.b16 %v706, %v705
      %v716 = vpack.c.b16 %v708, %v707
      %725 = vmatpush.bf16.msra.mxu0 %v716
      %726 = vmatpush.bf16.msra.mxu0 %v715
      %727 = vmatpush.bf16.msra.mxu0 %v714
      %728 = vmatpush.bf16.msra.mxu0 %v713
      %729 = vmatpush.bf16.msra.mxu0 %v712
      %730 = vmatpush.bf16.msra.mxu0 %v711
      %731 = vmatpush.bf16.msra.mxu0 %v710
      %732 = vmatpush.bf16.msra.mxu0 %v709
      %733 = vmatmul.bf16.gmra.mxu0 %v290
      %v734 = vpop.f32.mrf.mxu0
      %v735 = vadd.f32 %v668, %v734
      %v736 = vpop.f32.mrf.mxu0
      %v737 = vadd.f32 %v670, %v736
      %738 = vmatmul.bf16.gmra.mxu0 %v291
      %v739 = vpop.f32.mrf.mxu0
      %v740 = vadd.f32 %v673, %v739
      %v741 = vpop.f32.mrf.mxu0
      %v742 = vadd.f32 %v675, %v741
      %743 = vdwg.mxu0
      %v744 = vld [vmem:[%s14] sm:$0x1]
      %v746 = vperm.slane %v744, 0
      %v748 = vadd.f32 %v735, %v746
      %v749 = vadd.f32 %v737, %v746
      %v750 = vadd.f32 %v740, %v746
      %v751 = vadd.f32 %v742, %v746
      %v752 = vpack.c.bf16 %v406, %v404
      %v753 = vpack.c.bf16 %v411, %v409
      %v754 = vld [vmem:[#allocation14] sm:$0xf]
      %v755 = vld [vmem:[#allocation14 + $0x4] sm:$0xf]
      %v756 = vld [vmem:[#allocation14 + $0x8] sm:$0xf]
      %v757 = vld [vmem:[#allocation14 + $0xc] sm:$0xf]
      %v758 = vld [vmem:[#allocation14 + $0x10] sm:$0xf]
      %v759 = vld [vmem:[#allocation14 + $0x14] sm:$0xf]
      %v760 = vld [vmem:[#allocation14 + $0x18] sm:$0xf]
      %v761 = vld [vmem:[#allocation14 + $0x1c] sm:$0xf]
      %v762 = vld [vmem:[#allocation14 + $0x20] sm:$0xf]
      %v763 = vld [vmem:[#allocation14 + $0x24] sm:$0xf]
      %v764 = vld [vmem:[#allocation14 + $0x28] sm:$0xf]
      %v765 = vld [vmem:[#allocation14 + $0x2c] sm:$0xf]
      %v766 = vld [vmem:[#allocation14 + $0x30] sm:$0xf]
      %v767 = vld [vmem:[#allocation14 + $0x34] sm:$0xf]
      %v768 = vld [vmem:[#allocation14 + $0x38] sm:$0xf]
      %v769 = vld [vmem:[#allocation14 + $0x3c] sm:$0xf]
      %v770 = vld [vmem:[#allocation15] sm:$0xf]
      %v771 = vld [vmem:[#allocation15 + $0x4] sm:$0xf]
      %v772 = vld [vmem:[#allocation15 + $0x8] sm:$0xf]
      %v773 = vld [vmem:[#allocation15 + $0xc] sm:$0xf]
      %v774 = vld [vmem:[#allocation15 + $0x10] sm:$0xf]
      %v775 = vld [vmem:[#allocation15 + $0x14] sm:$0xf]
      %v776 = vld [vmem:[#allocation15 + $0x18] sm:$0xf]
      %v777 = vld [vmem:[#allocation15 + $0x1c] sm:$0xf]
      %v778 = vld [vmem:[#allocation15 + $0x20] sm:$0xf]
      %v779 = vld [vmem:[#allocation15 + $0x24] sm:$0xf]
      %v780 = vld [vmem:[#allocation15 + $0x28] sm:$0xf]
      %v781 = vld [vmem:[#allocation15 + $0x2c] sm:$0xf]
      %v782 = vld [vmem:[#allocation15 + $0x30] sm:$0xf]
      %v783 = vld [vmem:[#allocation15 + $0x34] sm:$0xf]
      %v784 = vld [vmem:[#allocation15 + $0x38] sm:$0xf]
      %v785 = vld [vmem:[#allocation15 + $0x3c] sm:$0xf]
      %v802 = vunpack.c.l.b16 %v770
      %v803 = vunpack.c.l.b16 %v771
      %v804 = vunpack.c.l.b16 %v772
      %v805 = vunpack.c.l.b16 %v773
      %v806 = vunpack.c.l.b16 %v774
      %v807 = vunpack.c.l.b16 %v775
      %v808 = vunpack.c.l.b16 %v776
      %v809 = vunpack.c.l.b16 %v777
      %v810 = vunpack.c.l.b16 %v778
      %v811 = vunpack.c.l.b16 %v779
      %v812 = vunpack.c.l.b16 %v780
      %v813 = vunpack.c.l.b16 %v781
      %v814 = vunpack.c.l.b16 %v782
      %v815 = vunpack.c.l.b16 %v783
      %v816 = vunpack.c.l.b16 %v784
      %v817 = vunpack.c.l.b16 %v785
      %v818 = vpack.c.b16 %v803, %v802
      %v819 = vpack.c.b16 %v805, %v804
      %v820 = vpack.c.b16 %v807, %v806
      %v821 = vpack.c.b16 %v809, %v808
      %v822 = vpack.c.b16 %v811, %v810
      %v823 = vpack.c.b16 %v813, %v812
      %v824 = vpack.c.b16 %v815, %v814
      %v825 = vpack.c.b16 %v817, %v816
      %834 = vmatpush.bf16.msra.mxu0 %v825
      %835 = vmatpush.bf16.msra.mxu0 %v824
      %836 = vmatpush.bf16.msra.mxu0 %v823
      %837 = vmatpush.bf16.msra.mxu0 %v822
      %838 = vmatpush.bf16.msra.mxu0 %v821
      %839 = vmatpush.bf16.msra.mxu0 %v820
      %840 = vmatpush.bf16.msra.mxu0 %v819
      %841 = vmatpush.bf16.msra.mxu0 %v818
      %842 = vmatmul.bf16.gmra.mxu0 %v290
      %v843 = vpop.f32.mrf.mxu0
      %v844 = vadd.f32 0.0, %v843
      %v845 = vpop.f32.mrf.mxu0
      %v846 = vadd.f32 0.0, %v845
      %847 = vmatmul.bf16.gmra.mxu0 %v291
      %v848 = vpop.f32.mrf.mxu0
      %v849 = vadd.f32 0.0, %v848
      %v850 = vpop.f32.mrf.mxu0
      %v851 = vadd.f32 0.0, %v850
      %852 = vdwg.mxu0
      %v869 = vunpack.c.l.b16 %v754
      %v870 = vunpack.c.l.b16 %v755
      %v871 = vunpack.c.l.b16 %v756
      %v872 = vunpack.c.l.b16 %v757
      %v873 = vunpack.c.l.b16 %v758
      %v874 = vunpack.c.l.b16 %v759
      %v875 = vunpack.c.l.b16 %v760
      %v876 = vunpack.c.l.b16 %v761
      %v877 = vunpack.c.l.b16 %v762
      %v878 = vunpack.c.l.b16 %v763
      %v879 = vunpack.c.l.b16 %v764
      %v880 = vunpack.c.l.b16 %v765
      %v881 = vunpack.c.l.b16 %v766
      %v882 = vunpack.c.l.b16 %v767
      %v883 = vunpack.c.l.b16 %v768
      %v884 = vunpack.c.l.b16 %v769
      %v885 = vpack.c.b16 %v870, %v869
      %v886 = vpack.c.b16 %v872, %v871
      %v887 = vpack.c.b16 %v874, %v873
      %v888 = vpack.c.b16 %v876, %v875
      %v889 = vpack.c.b16 %v878, %v877
      %v890 = vpack.c.b16 %v880, %v879
      %v891 = vpack.c.b16 %v882, %v881
      %v892 = vpack.c.b16 %v884, %v883
      %901 = vmatpush.bf16.msra.mxu0 %v892
      %902 = vmatpush.bf16.msra.mxu0 %v891
      %903 = vmatpush.bf16.msra.mxu0 %v890
      %904 = vmatpush.bf16.msra.mxu0 %v889
      %905 = vmatpush.bf16.msra.mxu0 %v888
      %906 = vmatpush.bf16.msra.mxu0 %v887
      %907 = vmatpush.bf16.msra.mxu0 %v886
      %908 = vmatpush.bf16.msra.mxu0 %v885
      %909 = vmatmul.bf16.gmra.mxu0 %v752
      %v910 = vpop.f32.mrf.mxu0
      %v911 = vadd.f32 %v844, %v910
      %v912 = vpop.f32.mrf.mxu0
      %v913 = vadd.f32 %v846, %v912
      %914 = vmatmul.bf16.gmra.mxu0 %v753
      %v915 = vpop.f32.mrf.mxu0
      %v916 = vadd.f32 %v849, %v915
      %v917 = vpop.f32.mrf.mxu0
      %v918 = vadd.f32 %v851, %v917
      %919 = vdwg.mxu0
      %v920 = vpack.c.bf16 %v749, %v748
      %v921 = vpack.c.bf16 %v751, %v750
      %v922 = vld [vmem:[#allocation17] sm:$0xf]
      %v923 = vld [vmem:[#allocation17 + $0x4] sm:$0xf]
      %v924 = vld [vmem:[#allocation17 + $0x8] sm:$0xf]
      %v925 = vld [vmem:[#allocation17 + $0xc] sm:$0xf]
      %v926 = vld [vmem:[#allocation17 + $0x10] sm:$0xf]
      %v927 = vld [vmem:[#allocation17 + $0x14] sm:$0xf]
      %v928 = vld [vmem:[#allocation17 + $0x18] sm:$0xf]
      %v929 = vld [vmem:[#allocation17 + $0x1c] sm:$0xf]
      %v930 = vld [vmem:[#allocation17 + $0x20] sm:$0xf]
      %v931 = vld [vmem:[#allocation17 + $0x24] sm:$0xf]
      %v932 = vld [vmem:[#allocation17 + $0x28] sm:$0xf]
      %v933 = vld [vmem:[#allocation17 + $0x2c] sm:$0xf]
      %v934 = vld [vmem:[#allocation17 + $0x30] sm:$0xf]
      %v935 = vld [vmem:[#allocation17 + $0x34] sm:$0xf]
      %v936 = vld [vmem:[#allocation17 + $0x38] sm:$0xf]
      %v937 = vld [vmem:[#allocation17 + $0x3c] sm:$0xf]
      %v954 = vunpack.c.l.b16 %v922
      %v955 = vunpack.c.l.b16 %v923
      %v956 = vunpack.c.l.b16 %v924
      %v957 = vunpack.c.l.b16 %v925
      %v958 = vunpack.c.l.b16 %v926
      %v959 = vunpack.c.l.b16 %v927
      %v960 = vunpack.c.l.b16 %v928
      %v961 = vunpack.c.l.b16 %v929
      %v962 = vunpack.c.l.b16 %v930
      %v963 = vunpack.c.l.b16 %v931
      %v964 = vunpack.c.l.b16 %v932
      %v965 = vunpack.c.l.b16 %v933
      %v966 = vunpack.c.l.b16 %v934
      %v967 = vunpack.c.l.b16 %v935
      %v968 = vunpack.c.l.b16 %v936
      %v969 = vunpack.c.l.b16 %v937
      %v970 = vpack.c.b16 %v955, %v954
      %v971 = vpack.c.b16 %v957, %v956
      %v972 = vpack.c.b16 %v959, %v958
      %v973 = vpack.c.b16 %v961, %v960
      %v974 = vpack.c.b16 %v963, %v962
      %v975 = vpack.c.b16 %v965, %v964
      %v976 = vpack.c.b16 %v967, %v966
      %v977 = vpack.c.b16 %v969, %v968
      %986 = vmatpush.bf16.msra.mxu0 %v977
      %987 = vmatpush.bf16.msra.mxu0 %v976
      %988 = vmatpush.bf16.msra.mxu0 %v975
      %989 = vmatpush.bf16.msra.mxu0 %v974
      %990 = vmatpush.bf16.msra.mxu0 %v973
      %991 = vmatpush.bf16.msra.mxu0 %v972
      %992 = vmatpush.bf16.msra.mxu0 %v971
      %993 = vmatpush.bf16.msra.mxu0 %v970
      %994 = vmatmul.bf16.gmra.mxu0 %v920
      %v995 = vpop.f32.mrf.mxu0
      %v996 = vadd.f32 0.0, %v995
      %v997 = vpop.f32.mrf.mxu0
      %v998 = vadd.f32 0.0, %v997
      %999 = vmatmul.bf16.gmra.mxu0 %v921
      %v1000 = vpop.f32.mrf.mxu0
      %v1001 = vadd.f32 0.0, %v1000
      %v1002 = vpop.f32.mrf.mxu0
      %v1003 = vadd.f32 0.0, %v1002
      %1004 = vdwg.mxu0
      %v1005 = vadd.f32 %v911, %v996
      %v1006 = vadd.f32 %v913, %v998
      %v1007 = vadd.f32 %v916, %v1001
      %v1008 = vadd.f32 %v918, %v1003
      %v1009 = vld [vmem:[%s18] sm:$0x1]
      %v1011 = vperm.slane %v1009, 0
      %v1013 = vadd.f32 %v1005, %v1011
      %v1014 = vadd.f32 %v1006, %v1011
      %v1015 = vadd.f32 %v1007, %v1011
      %v1016 = vadd.f32 %v1008, %v1011
      %v1017 = vld [vmem:[%s7] sm:$0xff]
      %v1018 = vld [vmem:[%s7 + $0x8] sm:$0xff]
      %v1019 = vld [vmem:[%s7 + $0x10] sm:$0xff]
      %v1020 = vld [vmem:[%s7 + $0x18] sm:$0xff]
      %1022 = vset.pattern.permute.xlu0 0
      %1023 = vperm.xlu0 %1022, %v1017
      %v1024 = vpop.permute.xlu0 %1023
      %1027 = vset.pattern.permute.xlu0 0
      %1028 = vperm.xlu0 %1027, %v1018
      %v1029 = vpop.permute.xlu0 %1028
      %1032 = vset.pattern.permute.xlu0 0
      %1033 = vperm.xlu0 %1032, %v1019
      %v1034 = vpop.permute.xlu0 %1033
      %1037 = vset.pattern.permute.xlu0 0
      %1038 = vperm.xlu0 %1037, %v1020
      %v1039 = vpop.permute.xlu0 %1038
      %v1041 = vmul.f32 %v1013, %v1024
      %v1042 = vmul.f32 %v1014, %v1029
      %v1043 = vmul.f32 %v1015, %v1034
      %v1044 = vmul.f32 %v1016, %v1039
      %v1045 = vadd.f32 %v1041, %v1042
      %v1046 = vadd.f32 %v1045, %v1043
      %v1047 = vadd.f32 %v1046, %v1044
      %v1048 = vrot.slane %v1047, 4
      %v1049 = vadd.f32 %v1047, %v1048
      %v1050 = vrot.slane %v1049, 2
      %v1051 = vadd.f32 %v1049, %v1050
      %v1052 = vrot.slane %v1051, 1
      %v1053 = vadd.f32 %v1051, %v1052
      %v1054 = vmul.f32 %v1041, %v1013
      %v1055 = vmul.f32 %v1042, %v1014
      %v1056 = vmul.f32 %v1043, %v1015
      %v1057 = vmul.f32 %v1044, %v1016
      %v1058 = vadd.f32 %v1054, %v1055
      %v1059 = vadd.f32 %v1058, %v1056
      %v1060 = vadd.f32 %v1059, %v1057
      %v1061 = vrot.slane %v1060, 4
      %v1062 = vadd.f32 %v1060, %v1061
      %v1063 = vrot.slane %v1062, 2
      %v1064 = vadd.f32 %v1062, %v1063
      %v1065 = vrot.slane %v1064, 1
      %v1066 = vadd.f32 %v1064, %v1065
      %v1067 = vpack.c.bf16 %v1013, %v1013
      %v1068 = vpack.c.bf16 %v1014, %v1014
      %v1069 = vpack.c.bf16 %v1015, %v1015
      %v1070 = vpack.c.bf16 %v1016, %v1016
      %1071 = vst [vmem:[#allocation18] sm:$0xf] %v1067
      %1072 = vst [vmem:[#allocation18 + $0x4] sm:$0xf] %v1068
      %1073 = vst [vmem:[#allocation18 + $0x8] sm:$0xf] %v1069
      %1074 = vst [vmem:[#allocation18 + $0xc] sm:$0xf] %v1070
      %vm1075 = vcmask 1040384
      %v1076 = vsel %vm1075, %v1053, %v1066
      %vm1077 = vcmask 1041408
      %v1078 = vsel %vm1077, %v1076, 0.0
      %1079 = vst [vmem:[#allocation19] sm:$0xff] %v1078
    $region121: #{tpu_custom_call.1} parent=1 // pred_fallthru
      _
    // Predicated region
    $region122: #{tpu_custom_call.1} parent=1 // pred_check
      _
    $region123: #{tpu_custom_call.1} parent=1 // pred_check_branch
      %1081 = sbr.rel (0) target = $region125
    $region124: #{tpu_custom_call.1} parent=1 // pred_region
      %1083 = vsyncadd [#allocation5], 0
      %s1084 = sshll.u32 [#allocation18], 4
      %s1085 = int_to_ptr.vmem [resolvable:$true] %s1084
      %s1086 = sshll.u32 %s19, 4
      %s1087 = int_to_ptr.hbm [resolvable:$true] %s1086
      %1092 = dma.vmem_to_hbm [thread:$0]  %s1085, 256, %s1087, [#allocation5], 64, 64, 4
    $region125: #{tpu_custom_call.1} parent=1 // pred_fallthru
      _
    // Predicated region
    $region126: #{tpu_custom_call.1} parent=1 // pred_check
      _
    $region127: #{tpu_custom_call.1} parent=1 // pred_check_branch
      %1094 = sbr.rel (0) target = $region129
    $region128: #{tpu_custom_call.1} parent=1 // pred_region
      %1096 = vsyncadd [#allocation20], 0
      %s1098 = sshll.u32 [#allocation19], 4
      %s1099 = int_to_ptr.vmem [resolvable:$true] %s1098
      %s1100 = sshll.u32 %s20, 4
      %s1101 = int_to_ptr.hbm [resolvable:$true] %s1100
      %1103 = dma.vmem_to_hbm [thread:$0]  %s1099, 128, %s1101, [#allocation20]
    $region129: #{tpu_custom_call.1} parent=1 // pred_fallthru
      _
    // Predicated region
    $region130: #{tpu_custom_call.1} parent=1 // pred_check
      _
    $region131: #{tpu_custom_call.1} parent=1 // pred_check_branch
      %1105 = sbr.rel (0) target = $region133
    $region132: #{tpu_custom_call.1} parent=1 // pred_region
      %1107 = dma.done [#allocation5], 256
    $region133: #{tpu_custom_call.1} parent=1 // pred_fallthru
      _
    // Predicated region
    $region134: #{tpu_custom_call.1} parent=1 // pred_check
      _
    $region135: #{tpu_custom_call.1} parent=1 // pred_check_branch
      %1109 = sbr.rel (0) target = $region137
    $region136: #{tpu_custom_call.1} parent=1 // pred_region
      %1111 = dma.done [#allocation20], 128
    $region137: #{tpu_custom_call.1} parent=1 // pred_fallthru
      _
    %1112 = vsyncpa [#allocation4], 1
    %1113 = vsyncpa [#allocation7], 1
    %1114 = vsyncpa [#allocation10], 1
    %1115 = vsyncpa [#allocation13], 1
    %1116 = vsyncpa [#allocation16], 1
    %1117 = vsyncpa [#allocation5], 1
    %1118 = vsyncpa [#allocation20], 1

</llo_original>
